<compile_context>
chip_gen: v6e
topology: v6e:2x2x1
jax: 0.10.0
libtpu: 0.0.40
codegen_flags: <defaults>
</compile_context>

<pallas_src>
import jax
import jax.numpy as jnp
from jax.experimental import pallas as pl
from jax.experimental.pallas import tpu as pltpu

# --- module hyperparameters (consistent with the reference module) ---
embedding_size = 32
sequence_length = 8
num_heads = 4
head_size = 8          # num_heads * head_size == embedding_size (concat -> proj)
dropout_rate = 0.0     # eval-mode semantics: dropout is identity
batch_size = 2


# ---------------- Pallas kernel: fully fused MHA, whole batch in one step ----------------
def fused_mha_kernel(x_ref, wqkv_ref, wpb_ref, o_ref):
    # blocks: x (B,T,C), w_qkv (C, 3*H*hs), w_proj+bias (C+1, C), o (B, T*C)
    H, hs = num_heads, head_size
    B, T, C = batch_size, sequence_length, embedding_size

    x = x_ref[...]                                                     # (B, T, C) f32

    # Fused QKV for all heads & the whole batch: one MXU contraction.
    # NOTE(perf): cast operands to bf16 (keep f32 accumulation) if T/C grow;
    # at this toy size the matmuls are overhead-dominated so f32 is kept.
    qkv = jnp.einsum('btc,cf->btf', x, wqkv_ref[...],
                     preferred_element_type=jnp.float32)               # (B, T, 3*H*hs)

    # In-kernel additive causal mask (no HBM input). Large finite negative
    # instead of -inf so a fully-masked row could never produce NaN.
    row = jax.lax.broadcasted_iota(jnp.int32, (T, T), 0)
    col = jax.lax.broadcasted_iota(jnp.int32, (T, T), 1)
    mask = jnp.where(col <= row, 0.0, -1e30).astype(jnp.float32)       # (T, T)

    # Reference scales by x.shape[-1]**-0.5 == embedding_size**-0.5 (NOT head_size).
    scale = jnp.float32(C ** -0.5)

    # Unrolled static lane slices per head (no reshape/transpose relayout of qkv).
    ctx_heads = []
    for h in range(H):
        q = qkv[:, :, h * hs:(h + 1) * hs]                             # (B, T, hs)
        k = qkv[:, :, (H + h) * hs:(H + h + 1) * hs]                   # (B, T, hs)
        v = qkv[:, :, (2 * H + h) * hs:(2 * H + h + 1) * hs]           # (B, T, hs)

        s = jnp.einsum('btd,bsd->bts', q, k,
                       preferred_element_type=jnp.float32) * scale     # (B, T, T)
        s = s + mask                                                   # broadcast over batch

        # numerically stable softmax (f32), reciprocal on the EUP slot
        s = s - jnp.max(s, axis=-1, keepdims=True)
        p = jnp.exp(s)
        p = p * pl.reciprocal(jnp.sum(p, axis=-1, keepdims=True), approx=True)

        # dropout_rate == 0.0 / eval mode -> identity
        # TODO(synk): training-mode dropout (stochastic masking via pltpu PRNG) not implemented.

        ctx_heads.append(jnp.einsum('bts,bsd->btd', p, v,
                                    preferred_element_type=jnp.float32))  # (B, T, hs)

    # Head-concat into lane-contiguous columns (matches torch.cat head order).
    concat = jnp.concatenate(ctx_heads, axis=-1)                        # (B, T, H*hs) == (B,T,C)

    # Output projection + bias; bias is packed as the last row of wpb.
    w_proj = wpb_ref[:C, :]                                             # (C, C)
    b_proj = wpb_ref[C:C + 1, :]                                        # (1, C)
    out = jnp.einsum('btc,cd->btd', concat, w_proj,
                     preferred_element_type=jnp.float32) + b_proj       # (B, T, C)

    # Lane-dense store: (B, T*C) = (2, 256) -> unmasked 128-lane vst.
    o_ref[...] = out.reshape(B, T * C)


def multi_head_attention(x, params):
    """x: (B, T, C) -> (B, T, C). Single fused pallas_call, single grid step."""
    B, T, C = x.shape
    H, hs = num_heads, head_size
    out_flat = pl.pallas_call(
        fused_mha_kernel,
        out_shape=jax.ShapeDtypeStruct((B, T * C), jnp.float32),
        grid=(1,),
        in_specs=[
            pl.BlockSpec((B, T, C), lambda i: (0, 0, 0)),            # x (whole batch)
            pl.BlockSpec((C, 3 * H * hs), lambda i: (0, 0)),         # packed W_qkv
            pl.BlockSpec((C + 1, C), lambda i: (0, 0)),              # packed [W_proj; b_proj]
        ],
        out_specs=pl.BlockSpec((B, T * C), lambda i: (0, 0)),        # lane-dense output slab
        compiler_params=pltpu.CompilerParams(
            dimension_semantics=("arbitrary",)   # single step; no cross-TC split needed
        ),
    )(x, params["w_qkv"], params["w_projb"])
    return out_flat.reshape(B, T, C)


# ---------------- deterministic parameter init (PyTorch-style shapes, then packed) ----------------
def init_params(key):
    ks = jax.random.split(key, 5)
    # PyTorch Linear weight shape is (out_features, in_features): per-head (hs, C).
    wq_pt = jax.random.normal(ks[0], (num_heads, head_size, embedding_size), jnp.float32) * 0.02
    wk_pt = jax.random.normal(ks[1], (num_heads, head_size, embedding_size), jnp.float32) * 0.02
    wv_pt = jax.random.normal(ks[2], (num_heads, head_size, embedding_size), jnp.float32) * 0.02
    wp_pt = jax.random.normal(ks[3], (embedding_size, embedding_size), jnp.float32) * 0.02
    bp = jax.random.normal(ks[4], (embedding_size,), jnp.float32) * 0.02

    def pack(w_pt):
        # (H, hs, C) -> (C, H*hs); column h*hs + d == head h, output dim d (torch.cat order)
        return jnp.transpose(w_pt, (2, 0, 1)).reshape(embedding_size, num_heads * head_size)

    w_qkv = jnp.concatenate([pack(wq_pt), pack(wk_pt), pack(wv_pt)], axis=-1)   # (C, 3*H*hs)
    # Pack projection weight (transposed to (C_in, C_out)) and bias into one slab -> one DMA.
    w_projb = jnp.concatenate([wp_pt.T, bp.reshape(1, embedding_size)], axis=0)  # (C+1, C)

    return {"w_qkv": w_qkv, "w_projb": w_projb}


# ---------------- pure-JAX reference (same packed params) for correctness ----------------
def mha_reference(x, params):
    B, T, C = x.shape
    H, hs = num_heads, head_size
    w_proj = params["w_projb"][:C, :]
    b_proj = params["w_projb"][C:C + 1, :]

    qkv = x @ params["w_qkv"]                                   # (B, T, 3*H*hs)
    q, k, v = jnp.split(qkv, 3, axis=-1)

    def to_heads(t):
        return t.reshape(B, T, H, hs).transpose(0, 2, 1, 3)     # (B, H, T, hs)

    q, k, v = to_heads(q), to_heads(k), to_heads(v)
    s = jnp.einsum('bhtd,bhsd->bhts', q, k) * (C ** -0.5)
    tril = jnp.tril(jnp.ones((T, T), dtype=bool))
    s = jnp.where(tril, s, -jnp.inf)
    p = jax.nn.softmax(s, axis=-1)
    ctx = jnp.einsum('bhts,bhsd->bhtd', p, v)
    concat = ctx.transpose(0, 2, 1, 3).reshape(B, T, C)
    return concat @ w_proj + b_proj


if __name__ == "__main__":
    key = jax.random.PRNGKey(0)
    k_x, k_p = jax.random.split(key)
    x = jax.random.normal(k_x, (batch_size, sequence_length, embedding_size), jnp.float32)
    params = init_params(k_p)

    out = multi_head_attention(x, params)
    out = jax.block_until_ready(out)

    assert out.shape == (batch_size, sequence_length, embedding_size)
    assert jnp.all(jnp.isfinite(out))

    ref = mha_reference(x, params)
    # Slightly loosened tolerance because the kernel uses the EUP approximate
    # reciprocal for the softmax denominator (rel err ~1e-4).
    assert jnp.allclose(out, ref, rtol=1e-3, atol=1e-4), "mismatch vs pure-JAX reference"

    print("KERNEL_OK")
</pallas_src>

<mosaic_0001>
module attributes {stable_mosaic.version = 11 : i64} {
  func.func @fused_mha_kernel(%arg0: i32, %arg1: memref<2x8x32xf32, #tpu.memory_space<vmem>>, %arg2: memref<32x96xf32, #tpu.memory_space<vmem>>, %arg3: memref<33x32xf32, #tpu.memory_space<vmem>>, %arg4: memref<2x256xf32, #tpu.memory_space<vmem>>) attributes {dimension_semantics = [#tpu.dimension_semantics<arbitrary>], iteration_bounds = array<i64: 1>, scalar_prefetch = 0 : i64, scratch_operands = 0 : i64, tpu.core_type = #tpu.core_type<tc>, window_params = [{pipeline_mode = #tpu.pipeline_mode<synchronous>, transform_indices = @transform_0, window_bounds = array<i64: 2, 8, 32>}, {pipeline_mode = #tpu.pipeline_mode<synchronous>, transform_indices = @transform_1, window_bounds = array<i64: 32, 96>}, {pipeline_mode = #tpu.pipeline_mode<synchronous>, transform_indices = @transform_2, window_bounds = array<i64: 33, 32>}, {pipeline_mode = #tpu.pipeline_mode<synchronous>, transform_indices = @transform_3, window_bounds = array<i64: 2, 256>}]} {
    %c0 = arith.constant 0 : index
    %c0_0 = arith.constant 0 : index
    %c0_1 = arith.constant 0 : index
    %0 = vector.load %arg1[%c0, %c0_0, %c0_1] : memref<2x8x32xf32, #tpu.memory_space<vmem>>, vector<2x8x32xf32>
    %c0_2 = arith.constant 0 : index
    %c0_3 = arith.constant 0 : index
    %1 = vector.load %arg2[%c0_2, %c0_3] : memref<32x96xf32, #tpu.memory_space<vmem>>, vector<32x96xf32>
    "tpu.trace_start"() <{level = 10 : i32, message = "btc,cf->btf"}> : () -> ()
    %cst = arith.constant dense<0.000000e+00> : vector<2x8x96xf32>
    %2 = tpu.matmul %0, %1, %cst {dimension_numbers = #tpu.dot_dimension_numbers<[2], [0], [0, 1], [1], [0, 0, 0, 1, 1, 1], [], []>} : vector<2x8x32xf32>, vector<32x96xf32>, vector<2x8x96xf32> -> vector<2x8x96xf32>
    "tpu.trace_stop"() : () -> ()
    %3 = tpu.iota {dimensions = array<i32: 0>} : vector<8x8xi32>
    %4 = tpu.iota {dimensions = array<i32: 1>} : vector<8x8xi32>
    %5 = arith.cmpi sle, %4, %3 : vector<8x8xi32>
    %cst_4 = arith.constant 0.000000e+00 : f32
    %cst_5 = arith.constant -1.000000e+30 : f32
    %6 = vector.broadcast %cst_4 : f32 to vector<8x8xf32>
    %7 = vector.broadcast %cst_5 : f32 to vector<8x8xf32>
    %8 = arith.select %5, %6, %7 : vector<8x8xi1>, vector<8x8xf32>
    %9 = vector.extract_strided_slice %2 {offsets = [0, 0, 0], sizes = [2, 8, 8], strides = [1, 1, 1]} : vector<2x8x96xf32> to vector<2x8x8xf32>
    %10 = vector.extract_strided_slice %2 {offsets = [0, 0, 32], sizes = [2, 8, 8], strides = [1, 1, 1]} : vector<2x8x96xf32> to vector<2x8x8xf32>
    %11 = vector.extract_strided_slice %2 {offsets = [0, 0, 64], sizes = [2, 8, 8], strides = [1, 1, 1]} : vector<2x8x96xf32> to vector<2x8x8xf32>
    "tpu.trace_start"() <{level = 10 : i32, message = "btd,bsd->bts"}> : () -> ()
    %cst_6 = arith.constant dense<0.000000e+00> : vector<2x8x8xf32>
    %12 = tpu.matmul %9, %10, %cst_6 {dimension_numbers = #tpu.dot_dimension_numbers<[2], [2], [1], [1], [0, 0, 0, 1, 1, 1], [0], [0]>} : vector<2x8x8xf32>, vector<2x8x8xf32>, vector<2x8x8xf32> -> vector<2x8x8xf32>
    "tpu.trace_stop"() : () -> ()
    %cst_7 = arith.constant 0.176776692 : f32
    %13 = vector.broadcast %cst_7 : f32 to vector<2x8x8xf32>
    %14 = arith.mulf %12, %13 : vector<2x8x8xf32>
    %15 = vector.shape_cast %8 : vector<8x8xf32> to vector<1x8x8xf32>
    %16 = vector.broadcast %15 : vector<1x8x8xf32> to vector<2x8x8xf32>
    %17 = arith.addf %14, %16 : vector<2x8x8xf32>
    %cst_8 = arith.constant dense<0xFF800000> : vector<2x8xf32>
    %18 = vector.multi_reduction <maximumf>, %17, %cst_8 [2] : vector<2x8x8xf32> to vector<2x8xf32>
    %19 = vector.shape_cast %18 : vector<2x8xf32> to vector<2x8x1xf32>
    %20 = vector.broadcast %19 : vector<2x8x1xf32> to vector<2x8x8xf32>
    %21 = arith.subf %17, %20 : vector<2x8x8xf32>
    %22 = math.exp %21 : vector<2x8x8xf32>
    %cst_9 = arith.constant dense<0.000000e+00> : vector<2x8xf32>
    %23 = vector.multi_reduction <add>, %22, %cst_9 [2] : vector<2x8x8xf32> to vector<2x8xf32>
    %24 = vector.shape_cast %23 : vector<2x8xf32> to vector<2x8x1xf32>
    %25 = tpu.reciprocal %24 {approx = true} : vector<2x8x1xf32> -> vector<2x8x1xf32>
    %26 = vector.broadcast %25 : vector<2x8x1xf32> to vector<2x8x8xf32>
    %27 = arith.mulf %22, %26 : vector<2x8x8xf32>
    "tpu.trace_start"() <{level = 10 : i32, message = "bts,bsd->btd"}> : () -> ()
    %cst_10 = arith.constant dense<0.000000e+00> : vector<2x8x8xf32>
    %28 = tpu.matmul %27, %11, %cst_10 {dimension_numbers = #tpu.dot_dimension_numbers<[2], [1], [1], [2], [0, 0, 0, 1, 1, 2], [0], [0]>} : vector<2x8x8xf32>, vector<2x8x8xf32>, vector<2x8x8xf32> -> vector<2x8x8xf32>
    "tpu.trace_stop"() : () -> ()
    %29 = vector.extract_strided_slice %2 {offsets = [0, 0, 8], sizes = [2, 8, 8], strides = [1, 1, 1]} : vector<2x8x96xf32> to vector<2x8x8xf32>
    %30 = vector.extract_strided_slice %2 {offsets = [0, 0, 40], sizes = [2, 8, 8], strides = [1, 1, 1]} : vector<2x8x96xf32> to vector<2x8x8xf32>
    %31 = vector.extract_strided_slice %2 {offsets = [0, 0, 72], sizes = [2, 8, 8], strides = [1, 1, 1]} : vector<2x8x96xf32> to vector<2x8x8xf32>
    "tpu.trace_start"() <{level = 10 : i32, message = "btd,bsd->bts"}> : () -> ()
    %cst_11 = arith.constant dense<0.000000e+00> : vector<2x8x8xf32>
    %32 = tpu.matmul %29, %30, %cst_11 {dimension_numbers = #tpu.dot_dimension_numbers<[2], [2], [1], [1], [0, 0, 0, 1, 1, 1], [0], [0]>} : vector<2x8x8xf32>, vector<2x8x8xf32>, vector<2x8x8xf32> -> vector<2x8x8xf32>
    "tpu.trace_stop"() : () -> ()
    %cst_12 = arith.constant 0.176776692 : f32
    %33 = vector.broadcast %cst_12 : f32 to vector<2x8x8xf32>
    %34 = arith.mulf %32, %33 : vector<2x8x8xf32>
    %35 = vector.shape_cast %8 : vector<8x8xf32> to vector<1x8x8xf32>
    %36 = vector.broadcast %35 : vector<1x8x8xf32> to vector<2x8x8xf32>
    %37 = arith.addf %34, %36 : vector<2x8x8xf32>
    %cst_13 = arith.constant dense<0xFF800000> : vector<2x8xf32>
    %38 = vector.multi_reduction <maximumf>, %37, %cst_13 [2] : vector<2x8x8xf32> to vector<2x8xf32>
    %39 = vector.shape_cast %38 : vector<2x8xf32> to vector<2x8x1xf32>
    %40 = vector.broadcast %39 : vector<2x8x1xf32> to vector<2x8x8xf32>
    %41 = arith.subf %37, %40 : vector<2x8x8xf32>
    %42 = math.exp %41 : vector<2x8x8xf32>
    %cst_14 = arith.constant dense<0.000000e+00> : vector<2x8xf32>
    %43 = vector.multi_reduction <add>, %42, %cst_14 [2] : vector<2x8x8xf32> to vector<2x8xf32>
    %44 = vector.shape_cast %43 : vector<2x8xf32> to vector<2x8x1xf32>
    %45 = tpu.reciprocal %44 {approx = true} : vector<2x8x1xf32> -> vector<2x8x1xf32>
    %46 = vector.broadcast %45 : vector<2x8x1xf32> to vector<2x8x8xf32>
    %47 = arith.mulf %42, %46 : vector<2x8x8xf32>
    "tpu.trace_start"() <{level = 10 : i32, message = "bts,bsd->btd"}> : () -> ()
    %cst_15 = arith.constant dense<0.000000e+00> : vector<2x8x8xf32>
    %48 = tpu.matmul %47, %31, %cst_15 {dimension_numbers = #tpu.dot_dimension_numbers<[2], [1], [1], [2], [0, 0, 0, 1, 1, 2], [0], [0]>} : vector<2x8x8xf32>, vector<2x8x8xf32>, vector<2x8x8xf32> -> vector<2x8x8xf32>
    "tpu.trace_stop"() : () -> ()
    %49 = vector.extract_strided_slice %2 {offsets = [0, 0, 16], sizes = [2, 8, 8], strides = [1, 1, 1]} : vector<2x8x96xf32> to vector<2x8x8xf32>
    %50 = vector.extract_strided_slice %2 {offsets = [0, 0, 48], sizes = [2, 8, 8], strides = [1, 1, 1]} : vector<2x8x96xf32> to vector<2x8x8xf32>
    %51 = vector.extract_strided_slice %2 {offsets = [0, 0, 80], sizes = [2, 8, 8], strides = [1, 1, 1]} : vector<2x8x96xf32> to vector<2x8x8xf32>
    "tpu.trace_start"() <{level = 10 : i32, message = "btd,bsd->bts"}> : () -> ()
    %cst_16 = arith.constant dense<0.000000e+00> : vector<2x8x8xf32>
    %52 = tpu.matmul %49, %50, %cst_16 {dimension_numbers = #tpu.dot_dimension_numbers<[2], [2], [1], [1], [0, 0, 0, 1, 1, 1], [0], [0]>} : vector<2x8x8xf32>, vector<2x8x8xf32>, vector<2x8x8xf32> -> vector<2x8x8xf32>
    "tpu.trace_stop"() : () -> ()
    %cst_17 = arith.constant 0.176776692 : f32
    %53 = vector.broadcast %cst_17 : f32 to vector<2x8x8xf32>
    %54 = arith.mulf %52, %53 : vector<2x8x8xf32>
    %55 = vector.shape_cast %8 : vector<8x8xf32> to vector<1x8x8xf32>
    %56 = vector.broadcast %55 : vector<1x8x8xf32> to vector<2x8x8xf32>
    %57 = arith.addf %54, %56 : vector<2x8x8xf32>
    %cst_18 = arith.constant dense<0xFF800000> : vector<2x8xf32>
    %58 = vector.multi_reduction <maximumf>, %57, %cst_18 [2] : vector<2x8x8xf32> to vector<2x8xf32>
    %59 = vector.shape_cast %58 : vector<2x8xf32> to vector<2x8x1xf32>
    %60 = vector.broadcast %59 : vector<2x8x1xf32> to vector<2x8x8xf32>
    %61 = arith.subf %57, %60 : vector<2x8x8xf32>
    %62 = math.exp %61 : vector<2x8x8xf32>
    %cst_19 = arith.constant dense<0.000000e+00> : vector<2x8xf32>
    %63 = vector.multi_reduction <add>, %62, %cst_19 [2] : vector<2x8x8xf32> to vector<2x8xf32>
    %64 = vector.shape_cast %63 : vector<2x8xf32> to vector<2x8x1xf32>
    %65 = tpu.reciprocal %64 {approx = true} : vector<2x8x1xf32> -> vector<2x8x1xf32>
    %66 = vector.broadcast %65 : vector<2x8x1xf32> to vector<2x8x8xf32>
    %67 = arith.mulf %62, %66 : vector<2x8x8xf32>
    "tpu.trace_start"() <{level = 10 : i32, message = "bts,bsd->btd"}> : () -> ()
    %cst_20 = arith.constant dense<0.000000e+00> : vector<2x8x8xf32>
    %68 = tpu.matmul %67, %51, %cst_20 {dimension_numbers = #tpu.dot_dimension_numbers<[2], [1], [1], [2], [0, 0, 0, 1, 1, 2], [0], [0]>} : vector<2x8x8xf32>, vector<2x8x8xf32>, vector<2x8x8xf32> -> vector<2x8x8xf32>
    "tpu.trace_stop"() : () -> ()
    %69 = vector.extract_strided_slice %2 {offsets = [0, 0, 24], sizes = [2, 8, 8], strides = [1, 1, 1]} : vector<2x8x96xf32> to vector<2x8x8xf32>
    %70 = vector.extract_strided_slice %2 {offsets = [0, 0, 56], sizes = [2, 8, 8], strides = [1, 1, 1]} : vector<2x8x96xf32> to vector<2x8x8xf32>
    %71 = vector.extract_strided_slice %2 {offsets = [0, 0, 88], sizes = [2, 8, 8], strides = [1, 1, 1]} : vector<2x8x96xf32> to vector<2x8x8xf32>
    "tpu.trace_start"() <{level = 10 : i32, message = "btd,bsd->bts"}> : () -> ()
    %cst_21 = arith.constant dense<0.000000e+00> : vector<2x8x8xf32>
    %72 = tpu.matmul %69, %70, %cst_21 {dimension_numbers = #tpu.dot_dimension_numbers<[2], [2], [1], [1], [0, 0, 0, 1, 1, 1], [0], [0]>} : vector<2x8x8xf32>, vector<2x8x8xf32>, vector<2x8x8xf32> -> vector<2x8x8xf32>
    "tpu.trace_stop"() : () -> ()
    %cst_22 = arith.constant 0.176776692 : f32
    %73 = vector.broadcast %cst_22 : f32 to vector<2x8x8xf32>
    %74 = arith.mulf %72, %73 : vector<2x8x8xf32>
    %75 = vector.shape_cast %8 : vector<8x8xf32> to vector<1x8x8xf32>
    %76 = vector.broadcast %75 : vector<1x8x8xf32> to vector<2x8x8xf32>
    %77 = arith.addf %74, %76 : vector<2x8x8xf32>
    %cst_23 = arith.constant dense<0xFF800000> : vector<2x8xf32>
    %78 = vector.multi_reduction <maximumf>, %77, %cst_23 [2] : vector<2x8x8xf32> to vector<2x8xf32>
    %79 = vector.shape_cast %78 : vector<2x8xf32> to vector<2x8x1xf32>
    %80 = vector.broadcast %79 : vector<2x8x1xf32> to vector<2x8x8xf32>
    %81 = arith.subf %77, %80 : vector<2x8x8xf32>
    %82 = math.exp %81 : vector<2x8x8xf32>
    %cst_24 = arith.constant dense<0.000000e+00> : vector<2x8xf32>
    %83 = vector.multi_reduction <add>, %82, %cst_24 [2] : vector<2x8x8xf32> to vector<2x8xf32>
    %84 = vector.shape_cast %83 : vector<2x8xf32> to vector<2x8x1xf32>
    %85 = tpu.reciprocal %84 {approx = true} : vector<2x8x1xf32> -> vector<2x8x1xf32>
    %86 = vector.broadcast %85 : vector<2x8x1xf32> to vector<2x8x8xf32>
    %87 = arith.mulf %82, %86 : vector<2x8x8xf32>
    "tpu.trace_start"() <{level = 10 : i32, message = "bts,bsd->btd"}> : () -> ()
    %cst_25 = arith.constant dense<0.000000e+00> : vector<2x8x8xf32>
    %88 = tpu.matmul %87, %71, %cst_25 {dimension_numbers = #tpu.dot_dimension_numbers<[2], [1], [1], [2], [0, 0, 0, 1, 1, 2], [0], [0]>} : vector<2x8x8xf32>, vector<2x8x8xf32>, vector<2x8x8xf32> -> vector<2x8x8xf32>
    "tpu.trace_stop"() : () -> ()
    %89 = tpu.concatenate %28, %48, %68, %88 in 2 : vector<2x8x8xf32>, vector<2x8x8xf32>, vector<2x8x8xf32>, vector<2x8x8xf32> -> vector<2x8x32xf32>
    %c0_26 = arith.constant 0 : index
    %c0_27 = arith.constant 0 : index
    %90 = vector.load %arg3[%c0_26, %c0_27] : memref<33x32xf32, #tpu.memory_space<vmem>>, vector<32x32xf32>
    %c32 = arith.constant 32 : index
    %c0_28 = arith.constant 0 : index
    %91 = vector.load %arg3[%c32, %c0_28] : memref<33x32xf32, #tpu.memory_space<vmem>>, vector<1x32xf32>
    "tpu.trace_start"() <{level = 10 : i32, message = "btc,cd->btd"}> : () -> ()
    %cst_29 = arith.constant dense<0.000000e+00> : vector<2x8x32xf32>
    %92 = tpu.matmul %89, %90, %cst_29 {dimension_numbers = #tpu.dot_dimension_numbers<[2], [0], [0, 1], [1], [0, 0, 0, 1, 1, 1], [], []>} : vector<2x8x32xf32>, vector<32x32xf32>, vector<2x8x32xf32> -> vector<2x8x32xf32>
    "tpu.trace_stop"() : () -> ()
    %93 = vector.shape_cast %91 : vector<1x32xf32> to vector<1x1x32xf32>
    %94 = vector.broadcast %93 : vector<1x1x32xf32> to vector<2x8x32xf32>
    %95 = arith.addf %92, %94 : vector<2x8x32xf32>
    %96 = vector.shape_cast %95 : vector<2x8x32xf32> to vector<2x256xf32>
    %c0_30 = arith.constant 0 : index
    %c0_31 = arith.constant 0 : index
    %97 = vector.load %arg4[%c0_30, %c0_31] : memref<2x256xf32, #tpu.memory_space<vmem>>, vector<2x256xf32>
    tpu.vector_store %arg4[%c0_30, %c0_31], %96 {strides = array<i32>} : memref<2x256xf32, #tpu.memory_space<vmem>>, vector<2x256xf32>,
    return
  }
  func.func @transform_0(%arg0: i32) -> (i32, i32, i32) {
    %c0_i32 = arith.constant 0 : i32
    %c0_i32_0 = arith.constant 0 : i32
    %c0_i32_1 = arith.constant 0 : i32
    %c0_i32_2 = arith.constant 0 : i32
    return %c0_i32, %c0_i32_0, %c0_i32_1 : i32, i32, i32
  }
  func.func @transform_1(%arg0: i32) -> (i32, i32) {
    %c0_i32 = arith.constant 0 : i32
    %c0_i32_0 = arith.constant 0 : i32
    %c0_i32_1 = arith.constant 0 : i32
    return %c0_i32, %c0_i32_0 : i32, i32
  }
  func.func @transform_2(%arg0: i32) -> (i32, i32) {
    %c0_i32 = arith.constant 0 : i32
    %c0_i32_0 = arith.constant 0 : i32
    %c0_i32_1 = arith.constant 0 : i32
    return %c0_i32, %c0_i32_0 : i32, i32
  }
  func.func @transform_3(%arg0: i32) -> (i32, i32) {
    %c0_i32 = arith.constant 0 : i32
    %c0_i32_0 = arith.constant 0 : i32
    %c0_i32_1 = arith.constant 0 : i32
    return %c0_i32, %c0_i32_0 : i32, i32
  }
}

</mosaic_0001>

<llo_original>
// kernel: tpu_custom_call.1
$region0: #{tpu_custom_call.1}
  #allocation0 [shape = 'u32[]', space=smem, size = 0x4, offset = 0x4, fixed_abs, tag = 'smem constant byte address 0x4 - core index']
  #allocation1 [shape = 'u32[144,128]{1,0:T(1,128)}', space=vmem, size = 0x12000, scoped, tag = 'internal scratch']
  %s0 = inlined_call_operand.vmem [shape: f32[2,8,32], index: 0, kind: input, shape index: {}]
  %s1 = inlined_call_operand.vmem [shape: f32[32,96], index: 1, kind: input, shape index: {}]
  %s2 = inlined_call_operand.vmem [shape: f32[33,32], index: 2, kind: input, shape index: {}]
  %s3 = inlined_call_operand.hbm [shape: f32[2,256], index: 3, kind: output, shape index: {}]
  %s4 = sld [smem:[#allocation0]]
  $region22: #{tpu_custom_call.1} parent=0
    _
  %s6 = ssub.s32 1, %s4
  %s7 = scalar_select 0, %s6, %s4
  $region1: #{tpu_custom_call.1} parent=0
    #allocation2 [shape = 'u8[2048]{0}', space=vmem, size = 0x800, scoped, tag = 'output window, operand 0, single buffered']
    #allocation3 [shape = 's32[1]{0}', space=sflag, size = 0x4, scoped, tag = 'scoped memory for tpu_custom_call.1']
    %8 = vsyncpa [#allocation3], 0
    // Predicated region
    $region2: #{tpu_custom_call.1} parent=1 // pred_check
      _
    $region3: #{tpu_custom_call.1} parent=1 // pred_check_branch
      %10 = sbr.rel (0) target = $region5
    $region4: #{tpu_custom_call.1} parent=1 // pred_region
      _
    $region5: #{tpu_custom_call.1} parent=1 // pred_fallthru
      _
    // Predicated region
    $region6: #{tpu_custom_call.1} parent=1 // pred_check
      _
    $region7: #{tpu_custom_call.1} parent=1 // pred_check_branch
      %12 = sbr.rel (0) target = $region9
    $region8: #{tpu_custom_call.1} parent=1 // pred_region
      _
    $region9: #{tpu_custom_call.1} parent=1 // pred_fallthru
      _
    // Predicated region
    $region10: #{tpu_custom_call.1} parent=1 // pred_check
      _
    $region11: #{tpu_custom_call.1} parent=1 // pred_check_branch
      %14 = sbr.rel (0) target = $region13
    $region12: #{tpu_custom_call.1} parent=1 // pred_region
      _
    $region13: #{tpu_custom_call.1} parent=1 // pred_fallthru
      _
    %v15 = vld [vmem:[%s0] sm:$0xff]
    %v16 = vld [vmem:[%s0 + $0x8] sm:$0xff]
    %v17 = vld [vmem:[%s1] sm:$0xff]
    %v18 = vld [vmem:[%s1 + $0x8] sm:$0xff]
    %v19 = vld [vmem:[%s1 + $0x10] sm:$0xff]
    %v20 = vld [vmem:[%s1 + $0x18] sm:$0xff]
    %vm21 = vcmask 261120
    %v23 = vsel %vm21, %v15, 0
    %v26 = vsel %vm21, %v16, 0
    %28 = vmatprep.subr.mxu0 0.0
    %29 = vmatpush1.msra.mxu0 0.0
    %30 = vmatprep.subr.mxu0 0.0
    %31 = vmatpush1.msra.mxu0 0.0
    %32 = vmatprep.subr.mxu0 0.0
    %33 = vmatpush1.msra.mxu0 0.0
    %34 = vmatprep.subr.mxu0 0.0
    %35 = vmatpush1.msra.mxu0 0.0
    %36 = vmatprep.subr.mxu0 0.0
    %37 = vmatpush1.msra.mxu0 0.0
    %38 = vmatprep.subr.mxu0 0.0
    %39 = vmatpush1.msra.mxu0 0.0
    %40 = vmatprep.subr.mxu0 0.0
    %41 = vmatpush1.msra.mxu0 0.0
    %42 = vmatprep.subr.mxu0 0.0
    %43 = vmatpush1.msra.mxu0 0.0
    %44 = vmatprep.subr.mxu0 0.0
    %45 = vmatpush1.msra.mxu0 0.0
    %46 = vmatprep.subr.mxu0 0.0
    %47 = vmatpush1.msra.mxu0 0.0
    %48 = vmatprep.subr.mxu0 0.0
    %49 = vmatpush1.msra.mxu0 0.0
    %50 = vmatprep.subr.mxu0 0.0
    %51 = vmatpush1.msra.mxu0 0.0
    %52 = vmatprep.subr.mxu0 0.0
    %53 = vmatpush1.msra.mxu0 %v20
    %54 = vmatprep.subr.mxu0 0.0
    %55 = vmatpush1.msra.mxu0 %v19
    %56 = vmatprep.subr.mxu0 0.0
    %57 = vmatpush1.msra.mxu0 %v18
    %58 = vmatprep.subr.mxu0 0.0
    %59 = vmatpush1.msra.mxu0 %v17
    %60 = vmatprep.subr.mxu0 0.0
    %61 = vmatpush2.msra.mxu0 0.0
    %62 = vmatprep.subr.mxu0 0.0
    %63 = vmatpush2.msra.mxu0 0.0
    %64 = vmatprep.subr.mxu0 0.0
    %65 = vmatpush2.msra.mxu0 0.0
    %66 = vmatprep.subr.mxu0 0.0
    %67 = vmatpush2.msra.mxu0 0.0
    %68 = vmatprep.subr.mxu0 0.0
    %69 = vmatpush2.msra.mxu0 0.0
    %70 = vmatprep.subr.mxu0 0.0
    %71 = vmatpush2.msra.mxu0 0.0
    %72 = vmatprep.subr.mxu0 0.0
    %73 = vmatpush2.msra.mxu0 0.0
    %74 = vmatprep.subr.mxu0 0.0
    %75 = vmatpush2.msra.mxu0 0.0
    %76 = vmatprep.subr.mxu0 0.0
    %77 = vmatpush2.msra.mxu0 0.0
    %78 = vmatprep.subr.mxu0 0.0
    %79 = vmatpush2.msra.mxu0 0.0
    %80 = vmatprep.subr.mxu0 0.0
    %81 = vmatpush2.msra.mxu0 0.0
    %82 = vmatprep.subr.mxu0 0.0
    %83 = vmatpush2.msra.mxu0 0.0
    %84 = vmatprep.subr.mxu0 0.0
    %85 = vmatpush2.msra.mxu0 0.0
    %86 = vmatprep.subr.mxu0 0.0
    %87 = vmatpush2.msra.mxu0 0.0
    %88 = vmatprep.subr.mxu0 0.0
    %89 = vmatpush2.msra.mxu0 0.0
    %90 = vmatprep.subr.mxu0 0.0
    %91 = vmatpush2.msra.mxu0 0.0
    %92 = vmatprep.mubr.f32.mxu0 0.0
    %93 = vmatmul.mubr.f32.gmra.mxu0 %v23
    %v94 = vpop.f32.mrf.mxu0
    %v95 = vadd.f32 0.0, %v94
    %v96 = vpop.f32.mrf.mxu0
    %97 = vmatprep.mubr.f32.mxu0 0.0
    %98 = vmatmul.mubr.f32.gmra.mxu0 %v26
    %v99 = vpop.f32.mrf.mxu0
    %v100 = vadd.f32 0.0, %v99
    %v101 = vpop.f32.mrf.mxu0
    %102 = vdwg.mxu0
    %v103 = vlaneseq
    %v104 = vshrl.u32 %v103, 7
    %v105 = vlaneseq
    %v106 = vand.u32 %v105, 127
    %vm107 = vcmp.le.s32.totalorder %v106, %v104
    %v108 = vsel %vm107, 0.0, -1e+30
    %110 = vrot.lane.b32.xlu0 %v95, 96
    %v111 = vpop.permute.xlu0 %110
    %vm112 = vcmask 64512
    %v113 = vsel %vm112, %v95, 0
    %v115 = vsel %vm112, %v111, 0
    %117 = vmatprep.subr.mxu0 0.0
    %118 = vmatpush1.xpose.msra.mxu0 0.0
    %119 = vmatprep.subr.mxu0 0.0
    %120 = vmatpush1.xpose.msra.mxu0 0.0
    %121 = vmatprep.subr.mxu0 0.0
    %122 = vmatpush1.xpose.msra.mxu0 0.0
    %123 = vmatprep.subr.mxu0 0.0
    %124 = vmatpush1.xpose.msra.mxu0 0.0
    %125 = vmatprep.subr.mxu0 0.0
    %126 = vmatpush1.xpose.msra.mxu0 0.0
    %127 = vmatprep.subr.mxu0 0.0
    %128 = vmatpush1.xpose.msra.mxu0 0.0
    %129 = vmatprep.subr.mxu0 0.0
    %130 = vmatpush1.xpose.msra.mxu0 0.0
    %131 = vmatprep.subr.mxu0 0.0
    %132 = vmatpush1.xpose.msra.mxu0 0.0
    %133 = vmatprep.subr.mxu0 0.0
    %134 = vmatpush1.xpose.msra.mxu0 0.0
    %135 = vmatprep.subr.mxu0 0.0
    %136 = vmatpush1.xpose.msra.mxu0 0.0
    %137 = vmatprep.subr.mxu0 0.0
    %138 = vmatpush1.xpose.msra.mxu0 0.0
    %139 = vmatprep.subr.mxu0 0.0
    %140 = vmatpush1.xpose.msra.mxu0 0.0
    %141 = vmatprep.subr.mxu0 0.0
    %142 = vmatpush1.xpose.msra.mxu0 0.0
    %143 = vmatprep.subr.mxu0 0.0
    %144 = vmatpush1.xpose.msra.mxu0 0.0
    %145 = vmatprep.subr.mxu0 0.0
    %146 = vmatpush1.xpose.msra.mxu0 0.0
    %147 = vmatprep.subr.mxu0 0.0
    %148 = vmatpush1.xpose.msra.mxu0 %v115
    %149 = vmatprep.subr.mxu0 0.0
    %150 = vmatpush2.xpose.msra.mxu0 0.0
    %151 = vmatprep.subr.mxu0 0.0
    %152 = vmatpush2.xpose.msra.mxu0 0.0
    %153 = vmatprep.subr.mxu0 0.0
    %154 = vmatpush2.xpose.msra.mxu0 0.0
    %155 = vmatprep.subr.mxu0 0.0
    %156 = vmatpush2.xpose.msra.mxu0 0.0
    %157 = vmatprep.subr.mxu0 0.0
    %158 = vmatpush2.xpose.msra.mxu0 0.0
    %159 = vmatprep.subr.mxu0 0.0
    %160 = vmatpush2.xpose.msra.mxu0 0.0
    %161 = vmatprep.subr.mxu0 0.0
    %162 = vmatpush2.xpose.msra.mxu0 0.0
    %163 = vmatprep.subr.mxu0 0.0
    %164 = vmatpush2.xpose.msra.mxu0 0.0
    %165 = vmatprep.subr.mxu0 0.0
    %166 = vmatpush2.xpose.msra.mxu0 0.0
    %167 = vmatprep.subr.mxu0 0.0
    %168 = vmatpush2.xpose.msra.mxu0 0.0
    %169 = vmatprep.subr.mxu0 0.0
    %170 = vmatpush2.xpose.msra.mxu0 0.0
    %171 = vmatprep.subr.mxu0 0.0
    %172 = vmatpush2.xpose.msra.mxu0 0.0
    %173 = vmatprep.subr.mxu0 0.0
    %174 = vmatpush2.xpose.msra.mxu0 0.0
    %175 = vmatprep.subr.mxu0 0.0
    %176 = vmatpush2.xpose.msra.mxu0 0.0
    %177 = vmatprep.subr.mxu0 0.0
    %178 = vmatpush2.xpose.msra.mxu0 0.0
    %179 = vmatprep.subr.mxu0 0.0
    %180 = vmatpush2.xpose.msra.mxu0 0.0
    %181 = vmatprep.mubr.f32.mxu0 0.0
    %182 = vmatmul.mubr.f32.gmra.mxu0 %v113
    %v183 = vpop.f32.mrf.mxu0
    %v184 = vadd.f32 0.0, %v183
    %v185 = vpop.f32.mrf.mxu0
    %186 = vdwg.mxu0
    %188 = vrot.lane.b32.xlu0 %v100, 96
    %v189 = vpop.permute.xlu0 %188
    %v190 = vsel %vm112, %v100, 0
    %v192 = vsel %vm112, %v189, 0
    %194 = vmatprep.subr.mxu0 0.0
    %195 = vmatpush1.xpose.msra.mxu0 0.0
    %196 = vmatprep.subr.mxu0 0.0
    %197 = vmatpush1.xpose.msra.mxu0 0.0
    %198 = vmatprep.subr.mxu0 0.0
    %199 = vmatpush1.xpose.msra.mxu0 0.0
    %200 = vmatprep.subr.mxu0 0.0
    %201 = vmatpush1.xpose.msra.mxu0 0.0
    %202 = vmatprep.subr.mxu0 0.0
    %203 = vmatpush1.xpose.msra.mxu0 0.0
    %204 = vmatprep.subr.mxu0 0.0
    %205 = vmatpush1.xpose.msra.mxu0 0.0
    %206 = vmatprep.subr.mxu0 0.0
    %207 = vmatpush1.xpose.msra.mxu0 0.0
    %208 = vmatprep.subr.mxu0 0.0
    %209 = vmatpush1.xpose.msra.mxu0 0.0
    %210 = vmatprep.subr.mxu0 0.0
    %211 = vmatpush1.xpose.msra.mxu0 0.0
    %212 = vmatprep.subr.mxu0 0.0
    %213 = vmatpush1.xpose.msra.mxu0 0.0
    %214 = vmatprep.subr.mxu0 0.0
    %215 = vmatpush1.xpose.msra.mxu0 0.0
    %216 = vmatprep.subr.mxu0 0.0
    %217 = vmatpush1.xpose.msra.mxu0 0.0
    %218 = vmatprep.subr.mxu0 0.0
    %219 = vmatpush1.xpose.msra.mxu0 0.0
    %220 = vmatprep.subr.mxu0 0.0
    %221 = vmatpush1.xpose.msra.mxu0 0.0
    %222 = vmatprep.subr.mxu0 0.0
    %223 = vmatpush1.xpose.msra.mxu0 0.0
    %224 = vmatprep.subr.mxu0 0.0
    %225 = vmatpush1.xpose.msra.mxu0 %v192
    %226 = vmatprep.subr.mxu0 0.0
    %227 = vmatpush2.xpose.msra.mxu0 0.0
    %228 = vmatprep.subr.mxu0 0.0
    %229 = vmatpush2.xpose.msra.mxu0 0.0
    %230 = vmatprep.subr.mxu0 0.0
    %231 = vmatpush2.xpose.msra.mxu0 0.0
    %232 = vmatprep.subr.mxu0 0.0
    %233 = vmatpush2.xpose.msra.mxu0 0.0
    %234 = vmatprep.subr.mxu0 0.0
    %235 = vmatpush2.xpose.msra.mxu0 0.0
    %236 = vmatprep.subr.mxu0 0.0
    %237 = vmatpush2.xpose.msra.mxu0 0.0
    %238 = vmatprep.subr.mxu0 0.0
    %239 = vmatpush2.xpose.msra.mxu0 0.0
    %240 = vmatprep.subr.mxu0 0.0
    %241 = vmatpush2.xpose.msra.mxu0 0.0
    %242 = vmatprep.subr.mxu0 0.0
    %243 = vmatpush2.xpose.msra.mxu0 0.0
    %244 = vmatprep.subr.mxu0 0.0
    %245 = vmatpush2.xpose.msra.mxu0 0.0
    %246 = vmatprep.subr.mxu0 0.0
    %247 = vmatpush2.xpose.msra.mxu0 0.0
    %248 = vmatprep.subr.mxu0 0.0
    %249 = vmatpush2.xpose.msra.mxu0 0.0
    %250 = vmatprep.subr.mxu0 0.0
    %251 = vmatpush2.xpose.msra.mxu0 0.0
    %252 = vmatprep.subr.mxu0 0.0
    %253 = vmatpush2.xpose.msra.mxu0 0.0
    %254 = vmatprep.subr.mxu0 0.0
    %255 = vmatpush2.xpose.msra.mxu0 0.0
    %256 = vmatprep.subr.mxu0 0.0
    %257 = vmatpush2.xpose.msra.mxu0 0.0
    %258 = vmatprep.mubr.f32.mxu0 0.0
    %259 = vmatmul.mubr.f32.gmra.mxu0 %v190
    %v260 = vpop.f32.mrf.mxu0
    %v261 = vadd.f32 0.0, %v260
    %v262 = vpop.f32.mrf.mxu0
    %263 = vdwg.mxu0
    %v264 = vmul.f32 %v184, 0.17677669
    %v265 = vmul.f32 %v261, 0.17677669
    %v266 = vadd.f32 %v264, %v108
    %v267 = vadd.f32 %v265, %v108
    %v268 = vsel %vm112, %v266, -inf
    %269 = vmax.xlane.f32.xlu0 %v268
    %v270 = vpop.xlane.xlu0 %269
    %v271 = vsel %vm112, %v267, -inf
    %272 = vmax.xlane.f32.xlu0 %v271
    %v273 = vpop.xlane.xlu0 %272
    %v274 = vsub.f32 %v266, %v270
    %v275 = vsub.f32 %v267, %v273
    %v276 = vmul.f32 %v274, 1.442695
    %v277 = vpow.pop %v276
    %v278 = vmul.f32 %v275, 1.442695
    %v279 = vpow.pop %v278
    %v280 = vsel %vm112, %v277, 0.0
    %281 = vadd.xlane.f32.xlu0 %v280
    %v282 = vpop.xlane.xlu0 %281
    %v283 = vsel %vm112, %v279, 0.0
    %284 = vadd.xlane.f32.xlu0 %v283
    %v285 = vpop.xlane.xlu0 %284
    %v286 = vrcp.pop %v282
    %v287 = vrcp.pop %v285
    %v288 = vmul.f32 %v277, %v286
    %v289 = vmul.f32 %v279, %v287
    %290 = vrot.lane.b32.xlu0 %v95, 64
    %v291 = vpop.permute.xlu0 %290
    %v294 = vsel %vm112, %v288, 0
    %296 = vmatprep.subr.mxu0 0.0
    %297 = vmatpush1.msra.mxu0 0.0
    %298 = vmatprep.subr.mxu0 0.0
    %299 = vmatpush1.msra.mxu0 0.0
    %300 = vmatprep.subr.mxu0 0.0
    %301 = vmatpush1.msra.mxu0 0.0
    %302 = vmatprep.subr.mxu0 0.0
    %303 = vmatpush1.msra.mxu0 0.0
    %304 = vmatprep.subr.mxu0 0.0
    %305 = vmatpush1.msra.mxu0 0.0
    %306 = vmatprep.subr.mxu0 0.0
    %307 = vmatpush1.msra.mxu0 0.0
    %308 = vmatprep.subr.mxu0 0.0
    %309 = vmatpush1.msra.mxu0 0.0
    %310 = vmatprep.subr.mxu0 0.0
    %311 = vmatpush1.msra.mxu0 0.0
    %312 = vmatprep.subr.mxu0 0.0
    %313 = vmatpush1.msra.mxu0 0.0
    %314 = vmatprep.subr.mxu0 0.0
    %315 = vmatpush1.msra.mxu0 0.0
    %316 = vmatprep.subr.mxu0 0.0
    %317 = vmatpush1.msra.mxu0 0.0
    %318 = vmatprep.subr.mxu0 0.0
    %319 = vmatpush1.msra.mxu0 0.0
    %320 = vmatprep.subr.mxu0 0.0
    %321 = vmatpush1.msra.mxu0 0.0
    %322 = vmatprep.subr.mxu0 0.0
    %323 = vmatpush1.msra.mxu0 0.0
    %324 = vmatprep.subr.mxu0 0.0
    %325 = vmatpush1.msra.mxu0 0.0
    %326 = vmatprep.subr.mxu0 0.0
    %327 = vmatpush1.msra.mxu0 %v291
    %328 = vmatprep.subr.mxu0 0.0
    %329 = vmatpush2.msra.mxu0 0.0
    %330 = vmatprep.subr.mxu0 0.0
    %331 = vmatpush2.msra.mxu0 0.0
    %332 = vmatprep.subr.mxu0 0.0
    %333 = vmatpush2.msra.mxu0 0.0
    %334 = vmatprep.subr.mxu0 0.0
    %335 = vmatpush2.msra.mxu0 0.0
    %336 = vmatprep.subr.mxu0 0.0
    %337 = vmatpush2.msra.mxu0 0.0
    %338 = vmatprep.subr.mxu0 0.0
    %339 = vmatpush2.msra.mxu0 0.0
    %340 = vmatprep.subr.mxu0 0.0
    %341 = vmatpush2.msra.mxu0 0.0
    %342 = vmatprep.subr.mxu0 0.0
    %343 = vmatpush2.msra.mxu0 0.0
    %344 = vmatprep.subr.mxu0 0.0
    %345 = vmatpush2.msra.mxu0 0.0
    %346 = vmatprep.subr.mxu0 0.0
    %347 = vmatpush2.msra.mxu0 0.0
    %348 = vmatprep.subr.mxu0 0.0
    %349 = vmatpush2.msra.mxu0 0.0
    %350 = vmatprep.subr.mxu0 0.0
    %351 = vmatpush2.msra.mxu0 0.0
    %352 = vmatprep.subr.mxu0 0.0
    %353 = vmatpush2.msra.mxu0 0.0
    %354 = vmatprep.subr.mxu0 0.0
    %355 = vmatpush2.msra.mxu0 0.0
    %356 = vmatprep.subr.mxu0 0.0
    %357 = vmatpush2.msra.mxu0 0.0
    %358 = vmatprep.subr.mxu0 0.0
    %359 = vmatpush2.msra.mxu0 0.0
    %360 = vmatprep.mubr.f32.mxu0 0.0
    %361 = vmatmul.mubr.f32.gmra.mxu0 %v294
    %v362 = vpop.f32.mrf.mxu0
    %v363 = vadd.f32 0.0, %v362
    %v364 = vpop.f32.mrf.mxu0
    %365 = vdwg.mxu0
    %366 = vrot.lane.b32.xlu0 %v100, 64
    %v367 = vpop.permute.xlu0 %366
    %v370 = vsel %vm112, %v289, 0
    %372 = vmatprep.subr.mxu0 0.0
    %373 = vmatpush1.msra.mxu0 0.0
    %374 = vmatprep.subr.mxu0 0.0
    %375 = vmatpush1.msra.mxu0 0.0
    %376 = vmatprep.subr.mxu0 0.0
    %377 = vmatpush1.msra.mxu0 0.0
    %378 = vmatprep.subr.mxu0 0.0
    %379 = vmatpush1.msra.mxu0 0.0
    %380 = vmatprep.subr.mxu0 0.0
    %381 = vmatpush1.msra.mxu0 0.0
    %382 = vmatprep.subr.mxu0 0.0
    %383 = vmatpush1.msra.mxu0 0.0
    %384 = vmatprep.subr.mxu0 0.0
    %385 = vmatpush1.msra.mxu0 0.0
    %386 = vmatprep.subr.mxu0 0.0
    %387 = vmatpush1.msra.mxu0 0.0
    %388 = vmatprep.subr.mxu0 0.0
    %389 = vmatpush1.msra.mxu0 0.0
    %390 = vmatprep.subr.mxu0 0.0
    %391 = vmatpush1.msra.mxu0 0.0
    %392 = vmatprep.subr.mxu0 0.0
    %393 = vmatpush1.msra.mxu0 0.0
    %394 = vmatprep.subr.mxu0 0.0
    %395 = vmatpush1.msra.mxu0 0.0
    %396 = vmatprep.subr.mxu0 0.0
    %397 = vmatpush1.msra.mxu0 0.0
    %398 = vmatprep.subr.mxu0 0.0
    %399 = vmatpush1.msra.mxu0 0.0
    %400 = vmatprep.subr.mxu0 0.0
    %401 = vmatpush1.msra.mxu0 0.0
    %402 = vmatprep.subr.mxu0 0.0
    %403 = vmatpush1.msra.mxu0 %v367
    %404 = vmatprep.subr.mxu0 0.0
    %405 = vmatpush2.msra.mxu0 0.0
    %406 = vmatprep.subr.mxu0 0.0
    %407 = vmatpush2.msra.mxu0 0.0
    %408 = vmatprep.subr.mxu0 0.0
    %409 = vmatpush2.msra.mxu0 0.0
    %410 = vmatprep.subr.mxu0 0.0
    %411 = vmatpush2.msra.mxu0 0.0
    %412 = vmatprep.subr.mxu0 0.0
    %413 = vmatpush2.msra.mxu0 0.0
    %414 = vmatprep.subr.mxu0 0.0
    %415 = vmatpush2.msra.mxu0 0.0
    %416 = vmatprep.subr.mxu0 0.0
    %417 = vmatpush2.msra.mxu0 0.0
    %418 = vmatprep.subr.mxu0 0.0
    %419 = vmatpush2.msra.mxu0 0.0
    %420 = vmatprep.subr.mxu0 0.0
    %421 = vmatpush2.msra.mxu0 0.0
    %422 = vmatprep.subr.mxu0 0.0
    %423 = vmatpush2.msra.mxu0 0.0
    %424 = vmatprep.subr.mxu0 0.0
    %425 = vmatpush2.msra.mxu0 0.0
    %426 = vmatprep.subr.mxu0 0.0
    %427 = vmatpush2.msra.mxu0 0.0
    %428 = vmatprep.subr.mxu0 0.0
    %429 = vmatpush2.msra.mxu0 0.0
    %430 = vmatprep.subr.mxu0 0.0
    %431 = vmatpush2.msra.mxu0 0.0
    %432 = vmatprep.subr.mxu0 0.0
    %433 = vmatpush2.msra.mxu0 0.0
    %434 = vmatprep.subr.mxu0 0.0
    %435 = vmatpush2.msra.mxu0 0.0
    %436 = vmatprep.mubr.f32.mxu0 0.0
    %437 = vmatmul.mubr.f32.gmra.mxu0 %v370
    %v438 = vpop.f32.mrf.mxu0
    %v439 = vadd.f32 0.0, %v438
    %v440 = vpop.f32.mrf.mxu0
    %441 = vdwg.mxu0
    %442 = vrot.lane.b32.xlu0 %v95, 120
    %v443 = vpop.permute.xlu0 %442
    %444 = vrot.lane.b32.xlu0 %v95, 88
    %v445 = vpop.permute.xlu0 %444
    %v446 = vsel %vm112, %v443, 0
    %v448 = vsel %vm112, %v445, 0
    %450 = vmatprep.subr.mxu0 0.0
    %451 = vmatpush1.xpose.msra.mxu0 0.0
    %452 = vmatprep.subr.mxu0 0.0
    %453 = vmatpush1.xpose.msra.mxu0 0.0
    %454 = vmatprep.subr.mxu0 0.0
    %455 = vmatpush1.xpose.msra.mxu0 0.0
    %456 = vmatprep.subr.mxu0 0.0
    %457 = vmatpush1.xpose.msra.mxu0 0.0
    %458 = vmatprep.subr.mxu0 0.0
    %459 = vmatpush1.xpose.msra.mxu0 0.0
    %460 = vmatprep.subr.mxu0 0.0
    %461 = vmatpush1.xpose.msra.mxu0 0.0
    %462 = vmatprep.subr.mxu0 0.0
    %463 = vmatpush1.xpose.msra.mxu0 0.0
    %464 = vmatprep.subr.mxu0 0.0
    %465 = vmatpush1.xpose.msra.mxu0 0.0
    %466 = vmatprep.subr.mxu0 0.0
    %467 = vmatpush1.xpose.msra.mxu0 0.0
    %468 = vmatprep.subr.mxu0 0.0
    %469 = vmatpush1.xpose.msra.mxu0 0.0
    %470 = vmatprep.subr.mxu0 0.0
    %471 = vmatpush1.xpose.msra.mxu0 0.0
    %472 = vmatprep.subr.mxu0 0.0
    %473 = vmatpush1.xpose.msra.mxu0 0.0
    %474 = vmatprep.subr.mxu0 0.0
    %475 = vmatpush1.xpose.msra.mxu0 0.0
    %476 = vmatprep.subr.mxu0 0.0
    %477 = vmatpush1.xpose.msra.mxu0 0.0
    %478 = vmatprep.subr.mxu0 0.0
    %479 = vmatpush1.xpose.msra.mxu0 0.0
    %480 = vmatprep.subr.mxu0 0.0
    %481 = vmatpush1.xpose.msra.mxu0 %v448
    %482 = vmatprep.subr.mxu0 0.0
    %483 = vmatpush2.xpose.msra.mxu0 0.0
    %484 = vmatprep.subr.mxu0 0.0
    %485 = vmatpush2.xpose.msra.mxu0 0.0
    %486 = vmatprep.subr.mxu0 0.0
    %487 = vmatpush2.xpose.msra.mxu0 0.0
    %488 = vmatprep.subr.mxu0 0.0
    %489 = vmatpush2.xpose.msra.mxu0 0.0
    %490 = vmatprep.subr.mxu0 0.0
    %491 = vmatpush2.xpose.msra.mxu0 0.0
    %492 = vmatprep.subr.mxu0 0.0
    %493 = vmatpush2.xpose.msra.mxu0 0.0
    %494 = vmatprep.subr.mxu0 0.0
    %495 = vmatpush2.xpose.msra.mxu0 0.0
    %496 = vmatprep.subr.mxu0 0.0
    %497 = vmatpush2.xpose.msra.mxu0 0.0
    %498 = vmatprep.subr.mxu0 0.0
    %499 = vmatpush2.xpose.msra.mxu0 0.0
    %500 = vmatprep.subr.mxu0 0.0
    %501 = vmatpush2.xpose.msra.mxu0 0.0
    %502 = vmatprep.subr.mxu0 0.0
    %503 = vmatpush2.xpose.msra.mxu0 0.0
    %504 = vmatprep.subr.mxu0 0.0
    %505 = vmatpush2.xpose.msra.mxu0 0.0
    %506 = vmatprep.subr.mxu0 0.0
    %507 = vmatpush2.xpose.msra.mxu0 0.0
    %508 = vmatprep.subr.mxu0 0.0
    %509 = vmatpush2.xpose.msra.mxu0 0.0
    %510 = vmatprep.subr.mxu0 0.0
    %511 = vmatpush2.xpose.msra.mxu0 0.0
    %512 = vmatprep.subr.mxu0 0.0
    %513 = vmatpush2.xpose.msra.mxu0 0.0
    %514 = vmatprep.mubr.f32.mxu0 0.0
    %515 = vmatmul.mubr.f32.gmra.mxu0 %v446
    %v516 = vpop.f32.mrf.mxu0
    %v517 = vadd.f32 0.0, %v516
    %v518 = vpop.f32.mrf.mxu0
    %519 = vdwg.mxu0
    %520 = vrot.lane.b32.xlu0 %v100, 120
    %v521 = vpop.permute.xlu0 %520
    %522 = vrot.lane.b32.xlu0 %v100, 88
    %v523 = vpop.permute.xlu0 %522
    %v524 = vsel %vm112, %v521, 0
    %v526 = vsel %vm112, %v523, 0
    %528 = vmatprep.subr.mxu0 0.0
    %529 = vmatpush1.xpose.msra.mxu0 0.0
    %530 = vmatprep.subr.mxu0 0.0
    %531 = vmatpush1.xpose.msra.mxu0 0.0
    %532 = vmatprep.subr.mxu0 0.0
    %533 = vmatpush1.xpose.msra.mxu0 0.0
    %534 = vmatprep.subr.mxu0 0.0
    %535 = vmatpush1.xpose.msra.mxu0 0.0
    %536 = vmatprep.subr.mxu0 0.0
    %537 = vmatpush1.xpose.msra.mxu0 0.0
    %538 = vmatprep.subr.mxu0 0.0
    %539 = vmatpush1.xpose.msra.mxu0 0.0
    %540 = vmatprep.subr.mxu0 0.0
    %541 = vmatpush1.xpose.msra.mxu0 0.0
    %542 = vmatprep.subr.mxu0 0.0
    %543 = vmatpush1.xpose.msra.mxu0 0.0
    %544 = vmatprep.subr.mxu0 0.0
    %545 = vmatpush1.xpose.msra.mxu0 0.0
    %546 = vmatprep.subr.mxu0 0.0
    %547 = vmatpush1.xpose.msra.mxu0 0.0
    %548 = vmatprep.subr.mxu0 0.0
    %549 = vmatpush1.xpose.msra.mxu0 0.0
    %550 = vmatprep.subr.mxu0 0.0
    %551 = vmatpush1.xpose.msra.mxu0 0.0
    %552 = vmatprep.subr.mxu0 0.0
    %553 = vmatpush1.xpose.msra.mxu0 0.0
    %554 = vmatprep.subr.mxu0 0.0
    %555 = vmatpush1.xpose.msra.mxu0 0.0
    %556 = vmatprep.subr.mxu0 0.0
    %557 = vmatpush1.xpose.msra.mxu0 0.0
    %558 = vmatprep.subr.mxu0 0.0
    %559 = vmatpush1.xpose.msra.mxu0 %v526
    %560 = vmatprep.subr.mxu0 0.0
    %561 = vmatpush2.xpose.msra.mxu0 0.0
    %562 = vmatprep.subr.mxu0 0.0
    %563 = vmatpush2.xpose.msra.mxu0 0.0
    %564 = vmatprep.subr.mxu0 0.0
    %565 = vmatpush2.xpose.msra.mxu0 0.0
    %566 = vmatprep.subr.mxu0 0.0
    %567 = vmatpush2.xpose.msra.mxu0 0.0
    %568 = vmatprep.subr.mxu0 0.0
    %569 = vmatpush2.xpose.msra.mxu0 0.0
    %570 = vmatprep.subr.mxu0 0.0
    %571 = vmatpush2.xpose.msra.mxu0 0.0
    %572 = vmatprep.subr.mxu0 0.0
    %573 = vmatpush2.xpose.msra.mxu0 0.0
    %574 = vmatprep.subr.mxu0 0.0
    %575 = vmatpush2.xpose.msra.mxu0 0.0
    %576 = vmatprep.subr.mxu0 0.0
    %577 = vmatpush2.xpose.msra.mxu0 0.0
    %578 = vmatprep.subr.mxu0 0.0
    %579 = vmatpush2.xpose.msra.mxu0 0.0
    %580 = vmatprep.subr.mxu0 0.0
    %581 = vmatpush2.xpose.msra.mxu0 0.0
    %582 = vmatprep.subr.mxu0 0.0
    %583 = vmatpush2.xpose.msra.mxu0 0.0
    %584 = vmatprep.subr.mxu0 0.0
    %585 = vmatpush2.xpose.msra.mxu0 0.0
    %586 = vmatprep.subr.mxu0 0.0
    %587 = vmatpush2.xpose.msra.mxu0 0.0
    %588 = vmatprep.subr.mxu0 0.0
    %589 = vmatpush2.xpose.msra.mxu0 0.0
    %590 = vmatprep.subr.mxu0 0.0
    %591 = vmatpush2.xpose.msra.mxu0 0.0
    %592 = vmatprep.mubr.f32.mxu0 0.0
    %593 = vmatmul.mubr.f32.gmra.mxu0 %v524
    %v594 = vpop.f32.mrf.mxu0
    %v595 = vadd.f32 0.0, %v594
    %v596 = vpop.f32.mrf.mxu0
    %597 = vdwg.mxu0
    %v598 = vmul.f32 %v517, 0.17677669
    %v599 = vmul.f32 %v595, 0.17677669
    %v600 = vadd.f32 %v598, %v108
    %v601 = vadd.f32 %v599, %v108
    %v602 = vsel %vm112, %v600, -inf
    %603 = vmax.xlane.f32.xlu0 %v602
    %v604 = vpop.xlane.xlu0 %603
    %v605 = vsel %vm112, %v601, -inf
    %606 = vmax.xlane.f32.xlu0 %v605
    %v607 = vpop.xlane.xlu0 %606
    %v608 = vsub.f32 %v600, %v604
    %v609 = vsub.f32 %v601, %v607
    %v610 = vmul.f32 %v608, 1.442695
    %v611 = vpow.pop %v610
    %v612 = vmul.f32 %v609, 1.442695
    %v613 = vpow.pop %v612
    %v614 = vsel %vm112, %v611, 0.0
    %615 = vadd.xlane.f32.xlu0 %v614
    %v616 = vpop.xlane.xlu0 %615
    %v617 = vsel %vm112, %v613, 0.0
    %618 = vadd.xlane.f32.xlu0 %v617
    %v619 = vpop.xlane.xlu0 %618
    %v620 = vrcp.pop %v616
    %v621 = vrcp.pop %v619
    %v622 = vmul.f32 %v611, %v620
    %v623 = vmul.f32 %v613, %v621
    %624 = vrot.lane.b32.xlu0 %v95, 56
    %v625 = vpop.permute.xlu0 %624
    %v628 = vsel %vm112, %v622, 0
    %630 = vmatprep.subr.mxu0 0.0
    %631 = vmatpush1.msra.mxu0 0.0
    %632 = vmatprep.subr.mxu0 0.0
    %633 = vmatpush1.msra.mxu0 0.0
    %634 = vmatprep.subr.mxu0 0.0
    %635 = vmatpush1.msra.mxu0 0.0
    %636 = vmatprep.subr.mxu0 0.0
    %637 = vmatpush1.msra.mxu0 0.0
    %638 = vmatprep.subr.mxu0 0.0
    %639 = vmatpush1.msra.mxu0 0.0
    %640 = vmatprep.subr.mxu0 0.0
    %641 = vmatpush1.msra.mxu0 0.0
    %642 = vmatprep.subr.mxu0 0.0
    %643 = vmatpush1.msra.mxu0 0.0
    %644 = vmatprep.subr.mxu0 0.0
    %645 = vmatpush1.msra.mxu0 0.0
    %646 = vmatprep.subr.mxu0 0.0
    %647 = vmatpush1.msra.mxu0 0.0
    %648 = vmatprep.subr.mxu0 0.0
    %649 = vmatpush1.msra.mxu0 0.0
    %650 = vmatprep.subr.mxu0 0.0
    %651 = vmatpush1.msra.mxu0 0.0
    %652 = vmatprep.subr.mxu0 0.0
    %653 = vmatpush1.msra.mxu0 0.0
    %654 = vmatprep.subr.mxu0 0.0
    %655 = vmatpush1.msra.mxu0 0.0
    %656 = vmatprep.subr.mxu0 0.0
    %657 = vmatpush1.msra.mxu0 0.0
    %658 = vmatprep.subr.mxu0 0.0
    %659 = vmatpush1.msra.mxu0 0.0
    %660 = vmatprep.subr.mxu0 0.0
    %661 = vmatpush1.msra.mxu0 %v625
    %662 = vmatprep.subr.mxu0 0.0
    %663 = vmatpush2.msra.mxu0 0.0
    %664 = vmatprep.subr.mxu0 0.0
    %665 = vmatpush2.msra.mxu0 0.0
    %666 = vmatprep.subr.mxu0 0.0
    %667 = vmatpush2.msra.mxu0 0.0
    %668 = vmatprep.subr.mxu0 0.0
    %669 = vmatpush2.msra.mxu0 0.0
    %670 = vmatprep.subr.mxu0 0.0
    %671 = vmatpush2.msra.mxu0 0.0
    %672 = vmatprep.subr.mxu0 0.0
    %673 = vmatpush2.msra.mxu0 0.0
    %674 = vmatprep.subr.mxu0 0.0
    %675 = vmatpush2.msra.mxu0 0.0
    %676 = vmatprep.subr.mxu0 0.0
    %677 = vmatpush2.msra.mxu0 0.0
    %678 = vmatprep.subr.mxu0 0.0
    %679 = vmatpush2.msra.mxu0 0.0
    %680 = vmatprep.subr.mxu0 0.0
    %681 = vmatpush2.msra.mxu0 0.0
    %682 = vmatprep.subr.mxu0 0.0
    %683 = vmatpush2.msra.mxu0 0.0
    %684 = vmatprep.subr.mxu0 0.0
    %685 = vmatpush2.msra.mxu0 0.0
    %686 = vmatprep.subr.mxu0 0.0
    %687 = vmatpush2.msra.mxu0 0.0
    %688 = vmatprep.subr.mxu0 0.0
    %689 = vmatpush2.msra.mxu0 0.0
    %690 = vmatprep.subr.mxu0 0.0
    %691 = vmatpush2.msra.mxu0 0.0
    %692 = vmatprep.subr.mxu0 0.0
    %693 = vmatpush2.msra.mxu0 0.0
    %694 = vmatprep.mubr.f32.mxu0 0.0
    %695 = vmatmul.mubr.f32.gmra.mxu0 %v628
    %v696 = vpop.f32.mrf.mxu0
    %v697 = vadd.f32 0.0, %v696
    %v698 = vpop.f32.mrf.mxu0
    %699 = vdwg.mxu0
    %700 = vrot.lane.b32.xlu0 %v100, 56
    %v701 = vpop.permute.xlu0 %700
    %v704 = vsel %vm112, %v623, 0
    %706 = vmatprep.subr.mxu0 0.0
    %707 = vmatpush1.msra.mxu0 0.0
    %708 = vmatprep.subr.mxu0 0.0
    %709 = vmatpush1.msra.mxu0 0.0
    %710 = vmatprep.subr.mxu0 0.0
    %711 = vmatpush1.msra.mxu0 0.0
    %712 = vmatprep.subr.mxu0 0.0
    %713 = vmatpush1.msra.mxu0 0.0
    %714 = vmatprep.subr.mxu0 0.0
    %715 = vmatpush1.msra.mxu0 0.0
    %716 = vmatprep.subr.mxu0 0.0
    %717 = vmatpush1.msra.mxu0 0.0
    %718 = vmatprep.subr.mxu0 0.0
    %719 = vmatpush1.msra.mxu0 0.0
    %720 = vmatprep.subr.mxu0 0.0
    %721 = vmatpush1.msra.mxu0 0.0
    %722 = vmatprep.subr.mxu0 0.0
    %723 = vmatpush1.msra.mxu0 0.0
    %724 = vmatprep.subr.mxu0 0.0
    %725 = vmatpush1.msra.mxu0 0.0
    %726 = vmatprep.subr.mxu0 0.0
    %727 = vmatpush1.msra.mxu0 0.0
    %728 = vmatprep.subr.mxu0 0.0
    %729 = vmatpush1.msra.mxu0 0.0
    %730 = vmatprep.subr.mxu0 0.0
    %731 = vmatpush1.msra.mxu0 0.0
    %732 = vmatprep.subr.mxu0 0.0
    %733 = vmatpush1.msra.mxu0 0.0
    %734 = vmatprep.subr.mxu0 0.0
    %735 = vmatpush1.msra.mxu0 0.0
    %736 = vmatprep.subr.mxu0 0.0
    %737 = vmatpush1.msra.mxu0 %v701
    %738 = vmatprep.subr.mxu0 0.0
    %739 = vmatpush2.msra.mxu0 0.0
    %740 = vmatprep.subr.mxu0 0.0
    %741 = vmatpush2.msra.mxu0 0.0
    %742 = vmatprep.subr.mxu0 0.0
    %743 = vmatpush2.msra.mxu0 0.0
    %744 = vmatprep.subr.mxu0 0.0
    %745 = vmatpush2.msra.mxu0 0.0
    %746 = vmatprep.subr.mxu0 0.0
    %747 = vmatpush2.msra.mxu0 0.0
    %748 = vmatprep.subr.mxu0 0.0
    %749 = vmatpush2.msra.mxu0 0.0
    %750 = vmatprep.subr.mxu0 0.0
    %751 = vmatpush2.msra.mxu0 0.0
    %752 = vmatprep.subr.mxu0 0.0
    %753 = vmatpush2.msra.mxu0 0.0
    %754 = vmatprep.subr.mxu0 0.0
    %755 = vmatpush2.msra.mxu0 0.0
    %756 = vmatprep.subr.mxu0 0.0
    %757 = vmatpush2.msra.mxu0 0.0
    %758 = vmatprep.subr.mxu0 0.0
    %759 = vmatpush2.msra.mxu0 0.0
    %760 = vmatprep.subr.mxu0 0.0
    %761 = vmatpush2.msra.mxu0 0.0
    %762 = vmatprep.subr.mxu0 0.0
    %763 = vmatpush2.msra.mxu0 0.0
    %764 = vmatprep.subr.mxu0 0.0
    %765 = vmatpush2.msra.mxu0 0.0
    %766 = vmatprep.subr.mxu0 0.0
    %767 = vmatpush2.msra.mxu0 0.0
    %768 = vmatprep.subr.mxu0 0.0
    %769 = vmatpush2.msra.mxu0 0.0
    %770 = vmatprep.mubr.f32.mxu0 0.0
    %771 = vmatmul.mubr.f32.gmra.mxu0 %v704
    %v772 = vpop.f32.mrf.mxu0
    %v773 = vadd.f32 0.0, %v772
    %v774 = vpop.f32.mrf.mxu0
    %775 = vdwg.mxu0
    %776 = vrot.lane.b32.xlu0 %v95, 112
    %v777 = vpop.permute.xlu0 %776
    %778 = vrot.lane.b32.xlu0 %v95, 80
    %v779 = vpop.permute.xlu0 %778
    %v780 = vsel %vm112, %v777, 0
    %v782 = vsel %vm112, %v779, 0
    %784 = vmatprep.subr.mxu0 0.0
    %785 = vmatpush1.xpose.msra.mxu0 0.0
    %786 = vmatprep.subr.mxu0 0.0
    %787 = vmatpush1.xpose.msra.mxu0 0.0
    %788 = vmatprep.subr.mxu0 0.0
    %789 = vmatpush1.xpose.msra.mxu0 0.0
    %790 = vmatprep.subr.mxu0 0.0
    %791 = vmatpush1.xpose.msra.mxu0 0.0
    %792 = vmatprep.subr.mxu0 0.0
    %793 = vmatpush1.xpose.msra.mxu0 0.0
    %794 = vmatprep.subr.mxu0 0.0
    %795 = vmatpush1.xpose.msra.mxu0 0.0
    %796 = vmatprep.subr.mxu0 0.0
    %797 = vmatpush1.xpose.msra.mxu0 0.0
    %798 = vmatprep.subr.mxu0 0.0
    %799 = vmatpush1.xpose.msra.mxu0 0.0
    %800 = vmatprep.subr.mxu0 0.0
    %801 = vmatpush1.xpose.msra.mxu0 0.0
    %802 = vmatprep.subr.mxu0 0.0
    %803 = vmatpush1.xpose.msra.mxu0 0.0
    %804 = vmatprep.subr.mxu0 0.0
    %805 = vmatpush1.xpose.msra.mxu0 0.0
    %806 = vmatprep.subr.mxu0 0.0
    %807 = vmatpush1.xpose.msra.mxu0 0.0
    %808 = vmatprep.subr.mxu0 0.0
    %809 = vmatpush1.xpose.msra.mxu0 0.0
    %810 = vmatprep.subr.mxu0 0.0
    %811 = vmatpush1.xpose.msra.mxu0 0.0
    %812 = vmatprep.subr.mxu0 0.0
    %813 = vmatpush1.xpose.msra.mxu0 0.0
    %814 = vmatprep.subr.mxu0 0.0
    %815 = vmatpush1.xpose.msra.mxu0 %v782
    %816 = vmatprep.subr.mxu0 0.0
    %817 = vmatpush2.xpose.msra.mxu0 0.0
    %818 = vmatprep.subr.mxu0 0.0
    %819 = vmatpush2.xpose.msra.mxu0 0.0
    %820 = vmatprep.subr.mxu0 0.0
    %821 = vmatpush2.xpose.msra.mxu0 0.0
    %822 = vmatprep.subr.mxu0 0.0
    %823 = vmatpush2.xpose.msra.mxu0 0.0
    %824 = vmatprep.subr.mxu0 0.0
    %825 = vmatpush2.xpose.msra.mxu0 0.0
    %826 = vmatprep.subr.mxu0 0.0
    %827 = vmatpush2.xpose.msra.mxu0 0.0
    %828 = vmatprep.subr.mxu0 0.0
    %829 = vmatpush2.xpose.msra.mxu0 0.0
    %830 = vmatprep.subr.mxu0 0.0
    %831 = vmatpush2.xpose.msra.mxu0 0.0
    %832 = vmatprep.subr.mxu0 0.0
    %833 = vmatpush2.xpose.msra.mxu0 0.0
    %834 = vmatprep.subr.mxu0 0.0
    %835 = vmatpush2.xpose.msra.mxu0 0.0
    %836 = vmatprep.subr.mxu0 0.0
    %837 = vmatpush2.xpose.msra.mxu0 0.0
    %838 = vmatprep.subr.mxu0 0.0
    %839 = vmatpush2.xpose.msra.mxu0 0.0
    %840 = vmatprep.subr.mxu0 0.0
    %841 = vmatpush2.xpose.msra.mxu0 0.0
    %842 = vmatprep.subr.mxu0 0.0
    %843 = vmatpush2.xpose.msra.mxu0 0.0
    %844 = vmatprep.subr.mxu0 0.0
    %845 = vmatpush2.xpose.msra.mxu0 0.0
    %846 = vmatprep.subr.mxu0 0.0
    %847 = vmatpush2.xpose.msra.mxu0 0.0
    %848 = vmatprep.mubr.f32.mxu0 0.0
    %849 = vmatmul.mubr.f32.gmra.mxu0 %v780
    %v850 = vpop.f32.mrf.mxu0
    %v851 = vadd.f32 0.0, %v850
    %v852 = vpop.f32.mrf.mxu0
    %853 = vdwg.mxu0
    %854 = vrot.lane.b32.xlu0 %v100, 112
    %v855 = vpop.permute.xlu0 %854
    %856 = vrot.lane.b32.xlu0 %v100, 80
    %v857 = vpop.permute.xlu0 %856
    %v858 = vsel %vm112, %v855, 0
    %v860 = vsel %vm112, %v857, 0
    %862 = vmatprep.subr.mxu0 0.0
    %863 = vmatpush1.xpose.msra.mxu0 0.0
    %864 = vmatprep.subr.mxu0 0.0
    %865 = vmatpush1.xpose.msra.mxu0 0.0
    %866 = vmatprep.subr.mxu0 0.0
    %867 = vmatpush1.xpose.msra.mxu0 0.0
    %868 = vmatprep.subr.mxu0 0.0
    %869 = vmatpush1.xpose.msra.mxu0 0.0
    %870 = vmatprep.subr.mxu0 0.0
    %871 = vmatpush1.xpose.msra.mxu0 0.0
    %872 = vmatprep.subr.mxu0 0.0
    %873 = vmatpush1.xpose.msra.mxu0 0.0
    %874 = vmatprep.subr.mxu0 0.0
    %875 = vmatpush1.xpose.msra.mxu0 0.0
    %876 = vmatprep.subr.mxu0 0.0
    %877 = vmatpush1.xpose.msra.mxu0 0.0
    %878 = vmatprep.subr.mxu0 0.0
    %879 = vmatpush1.xpose.msra.mxu0 0.0
    %880 = vmatprep.subr.mxu0 0.0
    %881 = vmatpush1.xpose.msra.mxu0 0.0
    %882 = vmatprep.subr.mxu0 0.0
    %883 = vmatpush1.xpose.msra.mxu0 0.0
    %884 = vmatprep.subr.mxu0 0.0
    %885 = vmatpush1.xpose.msra.mxu0 0.0
    %886 = vmatprep.subr.mxu0 0.0
    %887 = vmatpush1.xpose.msra.mxu0 0.0
    %888 = vmatprep.subr.mxu0 0.0
    %889 = vmatpush1.xpose.msra.mxu0 0.0
    %890 = vmatprep.subr.mxu0 0.0
    %891 = vmatpush1.xpose.msra.mxu0 0.0
    %892 = vmatprep.subr.mxu0 0.0
    %893 = vmatpush1.xpose.msra.mxu0 %v860
    %894 = vmatprep.subr.mxu0 0.0
    %895 = vmatpush2.xpose.msra.mxu0 0.0
    %896 = vmatprep.subr.mxu0 0.0
    %897 = vmatpush2.xpose.msra.mxu0 0.0
    %898 = vmatprep.subr.mxu0 0.0
    %899 = vmatpush2.xpose.msra.mxu0 0.0
    %900 = vmatprep.subr.mxu0 0.0
    %901 = vmatpush2.xpose.msra.mxu0 0.0
    %902 = vmatprep.subr.mxu0 0.0
    %903 = vmatpush2.xpose.msra.mxu0 0.0
    %904 = vmatprep.subr.mxu0 0.0
    %905 = vmatpush2.xpose.msra.mxu0 0.0
    %906 = vmatprep.subr.mxu0 0.0
    %907 = vmatpush2.xpose.msra.mxu0 0.0
    %908 = vmatprep.subr.mxu0 0.0
    %909 = vmatpush2.xpose.msra.mxu0 0.0
    %910 = vmatprep.subr.mxu0 0.0
    %911 = vmatpush2.xpose.msra.mxu0 0.0
    %912 = vmatprep.subr.mxu0 0.0
    %913 = vmatpush2.xpose.msra.mxu0 0.0
    %914 = vmatprep.subr.mxu0 0.0
    %915 = vmatpush2.xpose.msra.mxu0 0.0
    %916 = vmatprep.subr.mxu0 0.0
    %917 = vmatpush2.xpose.msra.mxu0 0.0
    %918 = vmatprep.subr.mxu0 0.0
    %919 = vmatpush2.xpose.msra.mxu0 0.0
    %920 = vmatprep.subr.mxu0 0.0
    %921 = vmatpush2.xpose.msra.mxu0 0.0
    %922 = vmatprep.subr.mxu0 0.0
    %923 = vmatpush2.xpose.msra.mxu0 0.0
    %924 = vmatprep.subr.mxu0 0.0
    %925 = vmatpush2.xpose.msra.mxu0 0.0
    %926 = vmatprep.mubr.f32.mxu0 0.0
    %927 = vmatmul.mubr.f32.gmra.mxu0 %v858
    %v928 = vpop.f32.mrf.mxu0
    %v929 = vadd.f32 0.0, %v928
    %v930 = vpop.f32.mrf.mxu0
    %931 = vdwg.mxu0
    %v932 = vmul.f32 %v851, 0.17677669
    %v933 = vmul.f32 %v929, 0.17677669
    %v934 = vadd.f32 %v932, %v108
    %v935 = vadd.f32 %v933, %v108
    %v936 = vsel %vm112, %v934, -inf
    %937 = vmax.xlane.f32.xlu0 %v936
    %v938 = vpop.xlane.xlu0 %937
    %v939 = vsel %vm112, %v935, -inf
    %940 = vmax.xlane.f32.xlu0 %v939
    %v941 = vpop.xlane.xlu0 %940
    %v942 = vsub.f32 %v934, %v938
    %v943 = vsub.f32 %v935, %v941
    %v944 = vmul.f32 %v942, 1.442695
    %v945 = vpow.pop %v944
    %v946 = vmul.f32 %v943, 1.442695
    %v947 = vpow.pop %v946
    %v948 = vsel %vm112, %v945, 0.0
    %949 = vadd.xlane.f32.xlu0 %v948
    %v950 = vpop.xlane.xlu0 %949
    %v951 = vsel %vm112, %v947, 0.0
    %952 = vadd.xlane.f32.xlu0 %v951
    %v953 = vpop.xlane.xlu0 %952
    %v954 = vrcp.pop %v950
    %v955 = vrcp.pop %v953
    %v956 = vmul.f32 %v945, %v954
    %v957 = vmul.f32 %v947, %v955
    %958 = vrot.lane.b32.xlu0 %v95, 48
    %v959 = vpop.permute.xlu0 %958
    %v962 = vsel %vm112, %v956, 0
    %964 = vmatprep.subr.mxu0 0.0
    %965 = vmatpush1.msra.mxu0 0.0
    %966 = vmatprep.subr.mxu0 0.0
    %967 = vmatpush1.msra.mxu0 0.0
    %968 = vmatprep.subr.mxu0 0.0
    %969 = vmatpush1.msra.mxu0 0.0
    %970 = vmatprep.subr.mxu0 0.0
    %971 = vmatpush1.msra.mxu0 0.0
    %972 = vmatprep.subr.mxu0 0.0
    %973 = vmatpush1.msra.mxu0 0.0
    %974 = vmatprep.subr.mxu0 0.0
    %975 = vmatpush1.msra.mxu0 0.0
    %976 = vmatprep.subr.mxu0 0.0
    %977 = vmatpush1.msra.mxu0 0.0
    %978 = vmatprep.subr.mxu0 0.0
    %979 = vmatpush1.msra.mxu0 0.0
    %980 = vmatprep.subr.mxu0 0.0
    %981 = vmatpush1.msra.mxu0 0.0
    %982 = vmatprep.subr.mxu0 0.0
    %983 = vmatpush1.msra.mxu0 0.0
    %984 = vmatprep.subr.mxu0 0.0
    %985 = vmatpush1.msra.mxu0 0.0
    %986 = vmatprep.subr.mxu0 0.0
    %987 = vmatpush1.msra.mxu0 0.0
    %988 = vmatprep.subr.mxu0 0.0
    %989 = vmatpush1.msra.mxu0 0.0
    %990 = vmatprep.subr.mxu0 0.0
    %991 = vmatpush1.msra.mxu0 0.0
    %992 = vmatprep.subr.mxu0 0.0
    %993 = vmatpush1.msra.mxu0 0.0
    %994 = vmatprep.subr.mxu0 0.0
    %995 = vmatpush1.msra.mxu0 %v959
    %996 = vmatprep.subr.mxu0 0.0
    %997 = vmatpush2.msra.mxu0 0.0
    %998 = vmatprep.subr.mxu0 0.0
    %999 = vmatpush2.msra.mxu0 0.0
    %1000 = vmatprep.subr.mxu0 0.0
    %1001 = vmatpush2.msra.mxu0 0.0
    %1002 = vmatprep.subr.mxu0 0.0
    %1003 = vmatpush2.msra.mxu0 0.0
    %1004 = vmatprep.subr.mxu0 0.0
    %1005 = vmatpush2.msra.mxu0 0.0
    %1006 = vmatprep.subr.mxu0 0.0
    %1007 = vmatpush2.msra.mxu0 0.0
    %1008 = vmatprep.subr.mxu0 0.0
    %1009 = vmatpush2.msra.mxu0 0.0
    %1010 = vmatprep.subr.mxu0 0.0
    %1011 = vmatpush2.msra.mxu0 0.0
    %1012 = vmatprep.subr.mxu0 0.0
    %1013 = vmatpush2.msra.mxu0 0.0
    %1014 = vmatprep.subr.mxu0 0.0
    %1015 = vmatpush2.msra.mxu0 0.0
    %1016 = vmatprep.subr.mxu0 0.0
    %1017 = vmatpush2.msra.mxu0 0.0
    %1018 = vmatprep.subr.mxu0 0.0
    %1019 = vmatpush2.msra.mxu0 0.0
    %1020 = vmatprep.subr.mxu0 0.0
    %1021 = vmatpush2.msra.mxu0 0.0
    %1022 = vmatprep.subr.mxu0 0.0
    %1023 = vmatpush2.msra.mxu0 0.0
    %1024 = vmatprep.subr.mxu0 0.0
    %1025 = vmatpush2.msra.mxu0 0.0
    %1026 = vmatprep.subr.mxu0 0.0
    %1027 = vmatpush2.msra.mxu0 0.0
    %1028 = vmatprep.mubr.f32.mxu0 0.0
    %1029 = vmatmul.mubr.f32.gmra.mxu0 %v962
    %v1030 = vpop.f32.mrf.mxu0
    %v1031 = vadd.f32 0.0, %v1030
    %v1032 = vpop.f32.mrf.mxu0
    %1033 = vdwg.mxu0
    %1034 = vrot.lane.b32.xlu0 %v100, 48
    %v1035 = vpop.permute.xlu0 %1034
    %v1038 = vsel %vm112, %v957, 0
    %1040 = vmatprep.subr.mxu0 0.0
    %1041 = vmatpush1.msra.mxu0 0.0
    %1042 = vmatprep.subr.mxu0 0.0
    %1043 = vmatpush1.msra.mxu0 0.0
    %1044 = vmatprep.subr.mxu0 0.0
    %1045 = vmatpush1.msra.mxu0 0.0
    %1046 = vmatprep.subr.mxu0 0.0
    %1047 = vmatpush1.msra.mxu0 0.0
    %1048 = vmatprep.subr.mxu0 0.0
    %1049 = vmatpush1.msra.mxu0 0.0
    %1050 = vmatprep.subr.mxu0 0.0
    %1051 = vmatpush1.msra.mxu0 0.0
    %1052 = vmatprep.subr.mxu0 0.0
    %1053 = vmatpush1.msra.mxu0 0.0
    %1054 = vmatprep.subr.mxu0 0.0
    %1055 = vmatpush1.msra.mxu0 0.0
    %1056 = vmatprep.subr.mxu0 0.0
    %1057 = vmatpush1.msra.mxu0 0.0
    %1058 = vmatprep.subr.mxu0 0.0
    %1059 = vmatpush1.msra.mxu0 0.0
    %1060 = vmatprep.subr.mxu0 0.0
    %1061 = vmatpush1.msra.mxu0 0.0
    %1062 = vmatprep.subr.mxu0 0.0
    %1063 = vmatpush1.msra.mxu0 0.0
    %1064 = vmatprep.subr.mxu0 0.0
    %1065 = vmatpush1.msra.mxu0 0.0
    %1066 = vmatprep.subr.mxu0 0.0
    %1067 = vmatpush1.msra.mxu0 0.0
    %1068 = vmatprep.subr.mxu0 0.0
    %1069 = vmatpush1.msra.mxu0 0.0
    %1070 = vmatprep.subr.mxu0 0.0
    %1071 = vmatpush1.msra.mxu0 %v1035
    %1072 = vmatprep.subr.mxu0 0.0
    %1073 = vmatpush2.msra.mxu0 0.0
    %1074 = vmatprep.subr.mxu0 0.0
    %1075 = vmatpush2.msra.mxu0 0.0
    %1076 = vmatprep.subr.mxu0 0.0
    %1077 = vmatpush2.msra.mxu0 0.0
    %1078 = vmatprep.subr.mxu0 0.0
    %1079 = vmatpush2.msra.mxu0 0.0
    %1080 = vmatprep.subr.mxu0 0.0
    %1081 = vmatpush2.msra.mxu0 0.0
    %1082 = vmatprep.subr.mxu0 0.0
    %1083 = vmatpush2.msra.mxu0 0.0
    %1084 = vmatprep.subr.mxu0 0.0
    %1085 = vmatpush2.msra.mxu0 0.0
    %1086 = vmatprep.subr.mxu0 0.0
    %1087 = vmatpush2.msra.mxu0 0.0
    %1088 = vmatprep.subr.mxu0 0.0
    %1089 = vmatpush2.msra.mxu0 0.0
    %1090 = vmatprep.subr.mxu0 0.0
    %1091 = vmatpush2.msra.mxu0 0.0
    %1092 = vmatprep.subr.mxu0 0.0
    %1093 = vmatpush2.msra.mxu0 0.0
    %1094 = vmatprep.subr.mxu0 0.0
    %1095 = vmatpush2.msra.mxu0 0.0
    %1096 = vmatprep.subr.mxu0 0.0
    %1097 = vmatpush2.msra.mxu0 0.0
    %1098 = vmatprep.subr.mxu0 0.0
    %1099 = vmatpush2.msra.mxu0 0.0
    %1100 = vmatprep.subr.mxu0 0.0
    %1101 = vmatpush2.msra.mxu0 0.0
    %1102 = vmatprep.subr.mxu0 0.0
    %1103 = vmatpush2.msra.mxu0 0.0
    %1104 = vmatprep.mubr.f32.mxu0 0.0
    %1105 = vmatmul.mubr.f32.gmra.mxu0 %v1038
    %v1106 = vpop.f32.mrf.mxu0
    %v1107 = vadd.f32 0.0, %v1106
    %v1108 = vpop.f32.mrf.mxu0
    %1109 = vdwg.mxu0
    %1110 = vrot.lane.b32.xlu0 %v95, 104
    %v1111 = vpop.permute.xlu0 %1110
    %1112 = vrot.lane.b32.xlu0 %v95, 72
    %v1113 = vpop.permute.xlu0 %1112
    %v1114 = vsel %vm112, %v1111, 0
    %v1116 = vsel %vm112, %v1113, 0
    %1118 = vmatprep.subr.mxu0 0.0
    %1119 = vmatpush1.xpose.msra.mxu0 0.0
    %1120 = vmatprep.subr.mxu0 0.0
    %1121 = vmatpush1.xpose.msra.mxu0 0.0
    %1122 = vmatprep.subr.mxu0 0.0
    %1123 = vmatpush1.xpose.msra.mxu0 0.0
    %1124 = vmatprep.subr.mxu0 0.0
    %1125 = vmatpush1.xpose.msra.mxu0 0.0
    %1126 = vmatprep.subr.mxu0 0.0
    %1127 = vmatpush1.xpose.msra.mxu0 0.0
    %1128 = vmatprep.subr.mxu0 0.0
    %1129 = vmatpush1.xpose.msra.mxu0 0.0
    %1130 = vmatprep.subr.mxu0 0.0
    %1131 = vmatpush1.xpose.msra.mxu0 0.0
    %1132 = vmatprep.subr.mxu0 0.0
    %1133 = vmatpush1.xpose.msra.mxu0 0.0
    %1134 = vmatprep.subr.mxu0 0.0
    %1135 = vmatpush1.xpose.msra.mxu0 0.0
    %1136 = vmatprep.subr.mxu0 0.0
    %1137 = vmatpush1.xpose.msra.mxu0 0.0
    %1138 = vmatprep.subr.mxu0 0.0
    %1139 = vmatpush1.xpose.msra.mxu0 0.0
    %1140 = vmatprep.subr.mxu0 0.0
    %1141 = vmatpush1.xpose.msra.mxu0 0.0
    %1142 = vmatprep.subr.mxu0 0.0
    %1143 = vmatpush1.xpose.msra.mxu0 0.0
    %1144 = vmatprep.subr.mxu0 0.0
    %1145 = vmatpush1.xpose.msra.mxu0 0.0
    %1146 = vmatprep.subr.mxu0 0.0
    %1147 = vmatpush1.xpose.msra.mxu0 0.0
    %1148 = vmatprep.subr.mxu0 0.0
    %1149 = vmatpush1.xpose.msra.mxu0 %v1116
    %1150 = vmatprep.subr.mxu0 0.0
    %1151 = vmatpush2.xpose.msra.mxu0 0.0
    %1152 = vmatprep.subr.mxu0 0.0
    %1153 = vmatpush2.xpose.msra.mxu0 0.0
    %1154 = vmatprep.subr.mxu0 0.0
    %1155 = vmatpush2.xpose.msra.mxu0 0.0
    %1156 = vmatprep.subr.mxu0 0.0
    %1157 = vmatpush2.xpose.msra.mxu0 0.0
    %1158 = vmatprep.subr.mxu0 0.0
    %1159 = vmatpush2.xpose.msra.mxu0 0.0
    %1160 = vmatprep.subr.mxu0 0.0
    %1161 = vmatpush2.xpose.msra.mxu0 0.0
    %1162 = vmatprep.subr.mxu0 0.0
    %1163 = vmatpush2.xpose.msra.mxu0 0.0
    %1164 = vmatprep.subr.mxu0 0.0
    %1165 = vmatpush2.xpose.msra.mxu0 0.0
    %1166 = vmatprep.subr.mxu0 0.0
    %1167 = vmatpush2.xpose.msra.mxu0 0.0
    %1168 = vmatprep.subr.mxu0 0.0
    %1169 = vmatpush2.xpose.msra.mxu0 0.0
    %1170 = vmatprep.subr.mxu0 0.0
    %1171 = vmatpush2.xpose.msra.mxu0 0.0
    %1172 = vmatprep.subr.mxu0 0.0
    %1173 = vmatpush2.xpose.msra.mxu0 0.0
    %1174 = vmatprep.subr.mxu0 0.0
    %1175 = vmatpush2.xpose.msra.mxu0 0.0
    %1176 = vmatprep.subr.mxu0 0.0
    %1177 = vmatpush2.xpose.msra.mxu0 0.0
    %1178 = vmatprep.subr.mxu0 0.0
    %1179 = vmatpush2.xpose.msra.mxu0 0.0
    %1180 = vmatprep.subr.mxu0 0.0
    %1181 = vmatpush2.xpose.msra.mxu0 0.0
    %1182 = vmatprep.mubr.f32.mxu0 0.0
    %1183 = vmatmul.mubr.f32.gmra.mxu0 %v1114
    %v1184 = vpop.f32.mrf.mxu0
    %v1185 = vadd.f32 0.0, %v1184
    %v1186 = vpop.f32.mrf.mxu0
    %1187 = vdwg.mxu0
    %1188 = vrot.lane.b32.xlu0 %v100, 104
    %v1189 = vpop.permute.xlu0 %1188
    %1190 = vrot.lane.b32.xlu0 %v100, 72
    %v1191 = vpop.permute.xlu0 %1190
    %v1192 = vsel %vm112, %v1189, 0
    %v1194 = vsel %vm112, %v1191, 0
    %1196 = vmatprep.subr.mxu0 0.0
    %1197 = vmatpush1.xpose.msra.mxu0 0.0
    %1198 = vmatprep.subr.mxu0 0.0
    %1199 = vmatpush1.xpose.msra.mxu0 0.0
    %1200 = vmatprep.subr.mxu0 0.0
    %1201 = vmatpush1.xpose.msra.mxu0 0.0
    %1202 = vmatprep.subr.mxu0 0.0
    %1203 = vmatpush1.xpose.msra.mxu0 0.0
    %1204 = vmatprep.subr.mxu0 0.0
    %1205 = vmatpush1.xpose.msra.mxu0 0.0
    %1206 = vmatprep.subr.mxu0 0.0
    %1207 = vmatpush1.xpose.msra.mxu0 0.0
    %1208 = vmatprep.subr.mxu0 0.0
    %1209 = vmatpush1.xpose.msra.mxu0 0.0
    %1210 = vmatprep.subr.mxu0 0.0
    %1211 = vmatpush1.xpose.msra.mxu0 0.0
    %1212 = vmatprep.subr.mxu0 0.0
    %1213 = vmatpush1.xpose.msra.mxu0 0.0
    %1214 = vmatprep.subr.mxu0 0.0
    %1215 = vmatpush1.xpose.msra.mxu0 0.0
    %1216 = vmatprep.subr.mxu0 0.0
    %1217 = vmatpush1.xpose.msra.mxu0 0.0
    %1218 = vmatprep.subr.mxu0 0.0
    %1219 = vmatpush1.xpose.msra.mxu0 0.0
    %1220 = vmatprep.subr.mxu0 0.0
    %1221 = vmatpush1.xpose.msra.mxu0 0.0
    %1222 = vmatprep.subr.mxu0 0.0
    %1223 = vmatpush1.xpose.msra.mxu0 0.0
    %1224 = vmatprep.subr.mxu0 0.0
    %1225 = vmatpush1.xpose.msra.mxu0 0.0
    %1226 = vmatprep.subr.mxu0 0.0
    %1227 = vmatpush1.xpose.msra.mxu0 %v1194
    %1228 = vmatprep.subr.mxu0 0.0
    %1229 = vmatpush2.xpose.msra.mxu0 0.0
    %1230 = vmatprep.subr.mxu0 0.0
    %1231 = vmatpush2.xpose.msra.mxu0 0.0
    %1232 = vmatprep.subr.mxu0 0.0
    %1233 = vmatpush2.xpose.msra.mxu0 0.0
    %1234 = vmatprep.subr.mxu0 0.0
    %1235 = vmatpush2.xpose.msra.mxu0 0.0
    %1236 = vmatprep.subr.mxu0 0.0
    %1237 = vmatpush2.xpose.msra.mxu0 0.0
    %1238 = vmatprep.subr.mxu0 0.0
    %1239 = vmatpush2.xpose.msra.mxu0 0.0
    %1240 = vmatprep.subr.mxu0 0.0
    %1241 = vmatpush2.xpose.msra.mxu0 0.0
    %1242 = vmatprep.subr.mxu0 0.0
    %1243 = vmatpush2.xpose.msra.mxu0 0.0
    %1244 = vmatprep.subr.mxu0 0.0
    %1245 = vmatpush2.xpose.msra.mxu0 0.0
    %1246 = vmatprep.subr.mxu0 0.0
    %1247 = vmatpush2.xpose.msra.mxu0 0.0
    %1248 = vmatprep.subr.mxu0 0.0
    %1249 = vmatpush2.xpose.msra.mxu0 0.0
    %1250 = vmatprep.subr.mxu0 0.0
    %1251 = vmatpush2.xpose.msra.mxu0 0.0
    %1252 = vmatprep.subr.mxu0 0.0
    %1253 = vmatpush2.xpose.msra.mxu0 0.0
    %1254 = vmatprep.subr.mxu0 0.0
    %1255 = vmatpush2.xpose.msra.mxu0 0.0
    %1256 = vmatprep.subr.mxu0 0.0
    %1257 = vmatpush2.xpose.msra.mxu0 0.0
    %1258 = vmatprep.subr.mxu0 0.0
    %1259 = vmatpush2.xpose.msra.mxu0 0.0
    %1260 = vmatprep.mubr.f32.mxu0 0.0
    %1261 = vmatmul.mubr.f32.gmra.mxu0 %v1192
    %v1262 = vpop.f32.mrf.mxu0
    %v1263 = vadd.f32 0.0, %v1262
    %v1264 = vpop.f32.mrf.mxu0
    %1265 = vdwg.mxu0
    %v1266 = vmul.f32 %v1185, 0.17677669
    %v1267 = vmul.f32 %v1263, 0.17677669
    %v1268 = vadd.f32 %v1266, %v108
    %v1269 = vadd.f32 %v1267, %v108
    %v1270 = vsel %vm112, %v1268, -inf
    %1271 = vmax.xlane.f32.xlu0 %v1270
    %v1272 = vpop.xlane.xlu0 %1271
    %v1273 = vsel %vm112, %v1269, -inf
    %1274 = vmax.xlane.f32.xlu0 %v1273
    %v1275 = vpop.xlane.xlu0 %1274
    %v1276 = vsub.f32 %v1268, %v1272
    %v1277 = vsub.f32 %v1269, %v1275
    %v1278 = vmul.f32 %v1276, 1.442695
    %v1279 = vpow.pop %v1278
    %v1280 = vmul.f32 %v1277, 1.442695
    %v1281 = vpow.pop %v1280
    %v1282 = vsel %vm112, %v1279, 0.0
    %1283 = vadd.xlane.f32.xlu0 %v1282
    %v1284 = vpop.xlane.xlu0 %1283
    %v1285 = vsel %vm112, %v1281, 0.0
    %1286 = vadd.xlane.f32.xlu0 %v1285
    %v1287 = vpop.xlane.xlu0 %1286
    %v1288 = vrcp.pop %v1284
    %v1289 = vrcp.pop %v1287
    %v1290 = vmul.f32 %v1279, %v1288
    %v1291 = vmul.f32 %v1281, %v1289
    %1292 = vrot.lane.b32.xlu0 %v95, 40
    %v1293 = vpop.permute.xlu0 %1292
    %v1296 = vsel %vm112, %v1290, 0
    %1298 = vmatprep.subr.mxu0 0.0
    %1299 = vmatpush1.msra.mxu0 0.0
    %1300 = vmatprep.subr.mxu0 0.0
    %1301 = vmatpush1.msra.mxu0 0.0
    %1302 = vmatprep.subr.mxu0 0.0
    %1303 = vmatpush1.msra.mxu0 0.0
    %1304 = vmatprep.subr.mxu0 0.0
    %1305 = vmatpush1.msra.mxu0 0.0
    %1306 = vmatprep.subr.mxu0 0.0
    %1307 = vmatpush1.msra.mxu0 0.0
    %1308 = vmatprep.subr.mxu0 0.0
    %1309 = vmatpush1.msra.mxu0 0.0
    %1310 = vmatprep.subr.mxu0 0.0
    %1311 = vmatpush1.msra.mxu0 0.0
    %1312 = vmatprep.subr.mxu0 0.0
    %1313 = vmatpush1.msra.mxu0 0.0
    %1314 = vmatprep.subr.mxu0 0.0
    %1315 = vmatpush1.msra.mxu0 0.0
    %1316 = vmatprep.subr.mxu0 0.0
    %1317 = vmatpush1.msra.mxu0 0.0
    %1318 = vmatprep.subr.mxu0 0.0
    %1319 = vmatpush1.msra.mxu0 0.0
    %1320 = vmatprep.subr.mxu0 0.0
    %1321 = vmatpush1.msra.mxu0 0.0
    %1322 = vmatprep.subr.mxu0 0.0
    %1323 = vmatpush1.msra.mxu0 0.0
    %1324 = vmatprep.subr.mxu0 0.0
    %1325 = vmatpush1.msra.mxu0 0.0
    %1326 = vmatprep.subr.mxu0 0.0
    %1327 = vmatpush1.msra.mxu0 0.0
    %1328 = vmatprep.subr.mxu0 0.0
    %1329 = vmatpush1.msra.mxu0 %v1293
    %1330 = vmatprep.subr.mxu0 0.0
    %1331 = vmatpush2.msra.mxu0 0.0
    %1332 = vmatprep.subr.mxu0 0.0
    %1333 = vmatpush2.msra.mxu0 0.0
    %1334 = vmatprep.subr.mxu0 0.0
    %1335 = vmatpush2.msra.mxu0 0.0
    %1336 = vmatprep.subr.mxu0 0.0
    %1337 = vmatpush2.msra.mxu0 0.0
    %1338 = vmatprep.subr.mxu0 0.0
    %1339 = vmatpush2.msra.mxu0 0.0
    %1340 = vmatprep.subr.mxu0 0.0
    %1341 = vmatpush2.msra.mxu0 0.0
    %1342 = vmatprep.subr.mxu0 0.0
    %1343 = vmatpush2.msra.mxu0 0.0
    %1344 = vmatprep.subr.mxu0 0.0
    %1345 = vmatpush2.msra.mxu0 0.0
    %1346 = vmatprep.subr.mxu0 0.0
    %1347 = vmatpush2.msra.mxu0 0.0
    %1348 = vmatprep.subr.mxu0 0.0
    %1349 = vmatpush2.msra.mxu0 0.0
    %1350 = vmatprep.subr.mxu0 0.0
    %1351 = vmatpush2.msra.mxu0 0.0
    %1352 = vmatprep.subr.mxu0 0.0
    %1353 = vmatpush2.msra.mxu0 0.0
    %1354 = vmatprep.subr.mxu0 0.0
    %1355 = vmatpush2.msra.mxu0 0.0
    %1356 = vmatprep.subr.mxu0 0.0
    %1357 = vmatpush2.msra.mxu0 0.0
    %1358 = vmatprep.subr.mxu0 0.0
    %1359 = vmatpush2.msra.mxu0 0.0
    %1360 = vmatprep.subr.mxu0 0.0
    %1361 = vmatpush2.msra.mxu0 0.0
    %1362 = vmatprep.mubr.f32.mxu0 0.0
    %1363 = vmatmul.mubr.f32.gmra.mxu0 %v1296
    %v1364 = vpop.f32.mrf.mxu0
    %v1365 = vadd.f32 0.0, %v1364
    %v1366 = vpop.f32.mrf.mxu0
    %1367 = vdwg.mxu0
    %1368 = vrot.lane.b32.xlu0 %v100, 40
    %v1369 = vpop.permute.xlu0 %1368
    %v1372 = vsel %vm112, %v1291, 0
    %1374 = vmatprep.subr.mxu0 0.0
    %1375 = vmatpush1.msra.mxu0 0.0
    %1376 = vmatprep.subr.mxu0 0.0
    %1377 = vmatpush1.msra.mxu0 0.0
    %1378 = vmatprep.subr.mxu0 0.0
    %1379 = vmatpush1.msra.mxu0 0.0
    %1380 = vmatprep.subr.mxu0 0.0
    %1381 = vmatpush1.msra.mxu0 0.0
    %1382 = vmatprep.subr.mxu0 0.0
    %1383 = vmatpush1.msra.mxu0 0.0
    %1384 = vmatprep.subr.mxu0 0.0
    %1385 = vmatpush1.msra.mxu0 0.0
    %1386 = vmatprep.subr.mxu0 0.0
    %1387 = vmatpush1.msra.mxu0 0.0
    %1388 = vmatprep.subr.mxu0 0.0
    %1389 = vmatpush1.msra.mxu0 0.0
    %1390 = vmatprep.subr.mxu0 0.0
    %1391 = vmatpush1.msra.mxu0 0.0
    %1392 = vmatprep.subr.mxu0 0.0
    %1393 = vmatpush1.msra.mxu0 0.0
    %1394 = vmatprep.subr.mxu0 0.0
    %1395 = vmatpush1.msra.mxu0 0.0
    %1396 = vmatprep.subr.mxu0 0.0
    %1397 = vmatpush1.msra.mxu0 0.0
    %1398 = vmatprep.subr.mxu0 0.0
    %1399 = vmatpush1.msra.mxu0 0.0
    %1400 = vmatprep.subr.mxu0 0.0
    %1401 = vmatpush1.msra.mxu0 0.0
    %1402 = vmatprep.subr.mxu0 0.0
    %1403 = vmatpush1.msra.mxu0 0.0
    %1404 = vmatprep.subr.mxu0 0.0
    %1405 = vmatpush1.msra.mxu0 %v1369
    %1406 = vmatprep.subr.mxu0 0.0
    %1407 = vmatpush2.msra.mxu0 0.0
    %1408 = vmatprep.subr.mxu0 0.0
    %1409 = vmatpush2.msra.mxu0 0.0
    %1410 = vmatprep.subr.mxu0 0.0
    %1411 = vmatpush2.msra.mxu0 0.0
    %1412 = vmatprep.subr.mxu0 0.0
    %1413 = vmatpush2.msra.mxu0 0.0
    %1414 = vmatprep.subr.mxu0 0.0
    %1415 = vmatpush2.msra.mxu0 0.0
    %1416 = vmatprep.subr.mxu0 0.0
    %1417 = vmatpush2.msra.mxu0 0.0
    %1418 = vmatprep.subr.mxu0 0.0
    %1419 = vmatpush2.msra.mxu0 0.0
    %1420 = vmatprep.subr.mxu0 0.0
    %1421 = vmatpush2.msra.mxu0 0.0
    %1422 = vmatprep.subr.mxu0 0.0
    %1423 = vmatpush2.msra.mxu0 0.0
    %1424 = vmatprep.subr.mxu0 0.0
    %1425 = vmatpush2.msra.mxu0 0.0
    %1426 = vmatprep.subr.mxu0 0.0
    %1427 = vmatpush2.msra.mxu0 0.0
    %1428 = vmatprep.subr.mxu0 0.0
    %1429 = vmatpush2.msra.mxu0 0.0
    %1430 = vmatprep.subr.mxu0 0.0
    %1431 = vmatpush2.msra.mxu0 0.0
    %1432 = vmatprep.subr.mxu0 0.0
    %1433 = vmatpush2.msra.mxu0 0.0
    %1434 = vmatprep.subr.mxu0 0.0
    %1435 = vmatpush2.msra.mxu0 0.0
    %1436 = vmatprep.subr.mxu0 0.0
    %1437 = vmatpush2.msra.mxu0 0.0
    %1438 = vmatprep.mubr.f32.mxu0 0.0
    %1439 = vmatmul.mubr.f32.gmra.mxu0 %v1372
    %v1440 = vpop.f32.mrf.mxu0
    %v1441 = vadd.f32 0.0, %v1440
    %v1442 = vpop.f32.mrf.mxu0
    %1443 = vdwg.mxu0
    %1446 = vrot.lane.b32.xlu0 %v697, 8
    %v1447 = vpop.permute.xlu0 %1446
    %1448 = vrot.lane.b32.xlu0 %v773, 8
    %v1449 = vpop.permute.xlu0 %1448
    %1454 = vrot.lane.b32.xlu0 %v1031, 16
    %v1455 = vpop.permute.xlu0 %1454
    %1456 = vrot.lane.b32.xlu0 %v1107, 16
    %v1457 = vpop.permute.xlu0 %1456
    %1462 = vrot.lane.b32.xlu0 %v1365, 24
    %v1463 = vpop.permute.xlu0 %1462
    %1464 = vrot.lane.b32.xlu0 %v1441, 24
    %v1465 = vpop.permute.xlu0 %1464
    %v1468 = vsel %vm112, %v363, %v1447
    %v1469 = vsel %vm112, %v439, %v1449
    %vm1470 = vcmask 130048
    %v1471 = vsel %vm1470, %v1468, %v1455
    %v1472 = vsel %vm1470, %v1469, %v1457
    %vm1473 = vcmask 195584
    %v1474 = vsel %vm1473, %v1471, %v1463
    %v1475 = vsel %vm1473, %v1472, %v1465
    %v1476 = vld [vmem:[%s2] sm:$0xff]
    %v1477 = vld [vmem:[%s2 + $0x8] sm:$0xff]
    %v1478 = vld [vmem:[%s2 + $0x10] sm:$0xff]
    %v1479 = vld [vmem:[%s2 + $0x18] sm:$0xff]
    %v1480 = vld [vmem:[%s2 + $0x20] sm:$0x1]
    %v1481 = vlaneseq
    %v1482 = vshrl.u32 %v1481, 7
    %v1483 = vsub.s32 0, %v1482
    %v1484 = vrot.slane %v1480, %v1483
    %v1486 = vsel %vm21, %v1474, 0
    %v1489 = vsel %vm21, %v1475, 0
    %1491 = vmatprep.subr.mxu0 0.0
    %1492 = vmatpush1.msra.mxu0 0.0
    %1493 = vmatprep.subr.mxu0 0.0
    %1494 = vmatpush1.msra.mxu0 0.0
    %1495 = vmatprep.subr.mxu0 0.0
    %1496 = vmatpush1.msra.mxu0 0.0
    %1497 = vmatprep.subr.mxu0 0.0
    %1498 = vmatpush1.msra.mxu0 0.0
    %1499 = vmatprep.subr.mxu0 0.0
    %1500 = vmatpush1.msra.mxu0 0.0
    %1501 = vmatprep.subr.mxu0 0.0
    %1502 = vmatpush1.msra.mxu0 0.0
    %1503 = vmatprep.subr.mxu0 0.0
    %1504 = vmatpush1.msra.mxu0 0.0
    %1505 = vmatprep.subr.mxu0 0.0
    %1506 = vmatpush1.msra.mxu0 0.0
    %1507 = vmatprep.subr.mxu0 0.0
    %1508 = vmatpush1.msra.mxu0 0.0
    %1509 = vmatprep.subr.mxu0 0.0
    %1510 = vmatpush1.msra.mxu0 0.0
    %1511 = vmatprep.subr.mxu0 0.0
    %1512 = vmatpush1.msra.mxu0 0.0
    %1513 = vmatprep.subr.mxu0 0.0
    %1514 = vmatpush1.msra.mxu0 0.0
    %1515 = vmatprep.subr.mxu0 0.0
    %1516 = vmatpush1.msra.mxu0 %v1479
    %1517 = vmatprep.subr.mxu0 0.0
    %1518 = vmatpush1.msra.mxu0 %v1478
    %1519 = vmatprep.subr.mxu0 0.0
    %1520 = vmatpush1.msra.mxu0 %v1477
    %1521 = vmatprep.subr.mxu0 0.0
    %1522 = vmatpush1.msra.mxu0 %v1476
    %1523 = vmatprep.subr.mxu0 0.0
    %1524 = vmatpush2.msra.mxu0 0.0
    %1525 = vmatprep.subr.mxu0 0.0
    %1526 = vmatpush2.msra.mxu0 0.0
    %1527 = vmatprep.subr.mxu0 0.0
    %1528 = vmatpush2.msra.mxu0 0.0
    %1529 = vmatprep.subr.mxu0 0.0
    %1530 = vmatpush2.msra.mxu0 0.0
    %1531 = vmatprep.subr.mxu0 0.0
    %1532 = vmatpush2.msra.mxu0 0.0
    %1533 = vmatprep.subr.mxu0 0.0
    %1534 = vmatpush2.msra.mxu0 0.0
    %1535 = vmatprep.subr.mxu0 0.0
    %1536 = vmatpush2.msra.mxu0 0.0
    %1537 = vmatprep.subr.mxu0 0.0
    %1538 = vmatpush2.msra.mxu0 0.0
    %1539 = vmatprep.subr.mxu0 0.0
    %1540 = vmatpush2.msra.mxu0 0.0
    %1541 = vmatprep.subr.mxu0 0.0
    %1542 = vmatpush2.msra.mxu0 0.0
    %1543 = vmatprep.subr.mxu0 0.0
    %1544 = vmatpush2.msra.mxu0 0.0
    %1545 = vmatprep.subr.mxu0 0.0
    %1546 = vmatpush2.msra.mxu0 0.0
    %1547 = vmatprep.subr.mxu0 0.0
    %1548 = vmatpush2.msra.mxu0 0.0
    %1549 = vmatprep.subr.mxu0 0.0
    %1550 = vmatpush2.msra.mxu0 0.0
    %1551 = vmatprep.subr.mxu0 0.0
    %1552 = vmatpush2.msra.mxu0 0.0
    %1553 = vmatprep.subr.mxu0 0.0
    %1554 = vmatpush2.msra.mxu0 0.0
    %1555 = vmatprep.mubr.f32.mxu0 0.0
    %1556 = vmatmul.mubr.f32.gmra.mxu0 %v1486
    %v1557 = vpop.f32.mrf.mxu0
    %v1558 = vadd.f32 %v1484, %v1557
    %v1559 = vpop.f32.mrf.mxu0
    %1560 = vmatprep.mubr.f32.mxu0 0.0
    %1561 = vmatmul.mubr.f32.gmra.mxu0 %v1489
    %v1562 = vpop.f32.mrf.mxu0
    %v1563 = vadd.f32 %v1484, %v1562
    %v1564 = vpop.f32.mrf.mxu0
    %1565 = vdwg.mxu0
    %v1566 = vcombine.high %v1558, 0.0
    %v1568 = vunpack.c.l.s4 1983009808
    %v1569 = vunpack.c.0.s8 %v1568
    %v1570 = vlaneseq
    %v1571 = vshrl.u32 %v1570, 7
    %v1572 = vsub.s32 %v1569, %v1571
    %v1573 = vrot.slane %v1558, %v1572
    %v1575 = vunpack.c.l.s4 1983009808
    %v1576 = vunpack.c.0.s8 %v1575
    %v1577 = vlaneseq
    %v1578 = vshrl.u32 %v1577, 7
    %v1579 = vsub.s32 %v1576, %v1578
    %v1580 = vrot.slane %v1566, %v1579
    %v1581 = vcombine.high %v1563, 0.0
    %v1583 = vunpack.c.l.s4 1983009808
    %v1584 = vunpack.c.0.s8 %v1583
    %v1585 = vlaneseq
    %v1586 = vshrl.u32 %v1585, 7
    %v1587 = vsub.s32 %v1584, %v1586
    %v1588 = vrot.slane %v1563, %v1587
    %v1590 = vunpack.c.l.s4 1983009808
    %v1591 = vunpack.c.0.s8 %v1590
    %v1592 = vlaneseq
    %v1593 = vshrl.u32 %v1592, 7
    %v1594 = vsub.s32 %v1591, %v1593
    %v1595 = vrot.slane %v1581, %v1594
    %v1596 = vcombine.low %v1573, %v1588
    %v1597 = vcombine.high %v1573, %v1588
    %v1599 = vunpack.c.l.s4 1934713408
    %v1600 = vunpack.c.0.s8 %v1599
    %v1601 = vlaneseq
    %v1602 = vshrl.u32 %v1601, 7
    %v1603 = vsub.s32 %v1600, %v1602
    %v1604 = vrot.slane %v1596, %v1603
    %v1606 = vunpack.c.l.s4 1934713408
    %v1607 = vunpack.c.0.s8 %v1606
    %v1608 = vlaneseq
    %v1609 = vshrl.u32 %v1608, 7
    %v1610 = vsub.s32 %v1607, %v1609
    %v1611 = vrot.slane %v1597, %v1610
    %v1612 = vcombine.low %v1580, %v1595
    %v1613 = vcombine.high %v1580, %v1595
    %v1615 = vunpack.c.l.s4 1934713408
    %v1616 = vunpack.c.0.s8 %v1615
    %v1617 = vlaneseq
    %v1618 = vshrl.u32 %v1617, 7
    %v1619 = vsub.s32 %v1616, %v1618
    %v1620 = vrot.slane %v1612, %v1619
    %v1622 = vunpack.c.l.s4 1934713408
    %v1623 = vunpack.c.0.s8 %v1622
    %v1624 = vlaneseq
    %v1625 = vshrl.u32 %v1624, 7
    %v1626 = vsub.s32 %v1623, %v1625
    %v1627 = vrot.slane %v1613, %v1626
    %v1628 = vcombine.high %v1604, 0.0
    %v1629 = vcombine.high %v1611, 0.0
    %v1630 = vcombine.high %v1620, 0.0
    %v1631 = vcombine.high %v1627, 0.0
    %1633 = vrot.lane.b32.xlu0 %v1628, 32
    %v1634 = vpop.permute.xlu0 %1633
    %1637 = vrot.lane.b32.xlu0 %v1611, 64
    %v1638 = vpop.permute.xlu0 %1637
    %1641 = vrot.lane.b32.xlu0 %v1629, 96
    %v1642 = vpop.permute.xlu0 %1641
    %1645 = vrot.lane.b32.xlu0 %v1630, 32
    %v1646 = vpop.permute.xlu0 %1645
    %1649 = vrot.lane.b32.xlu0 %v1627, 64
    %v1650 = vpop.permute.xlu0 %1649
    %1653 = vrot.lane.b32.xlu0 %v1631, 96
    %v1654 = vpop.permute.xlu0 %1653
    %v1656 = vsel %vm21, %v1604, %v1634
    %vm1657 = vcmask 523264
    %v1658 = vsel %vm1657, %v1656, %v1638
    %vm1659 = vcmask 785408
    %v1660 = vsel %vm1659, %v1658, %v1642
    %v1661 = vsel %vm21, %v1620, %v1646
    %v1662 = vsel %vm1657, %v1661, %v1650
    %v1663 = vsel %vm1659, %v1662, %v1654
    %v1666 = vcombine.low %v1660, %v1663
    %v1668 = vunpack.c.l.s4 1983009808
    %v1669 = vunpack.c.0.s8 %v1668
    %v1670 = vlaneseq
    %v1671 = vshrl.u32 %v1670, 7
    %v1672 = vsub.s32 %v1669, %v1671
    %v1673 = vrot.slane %v1666, %v1672
    %1675 = vst [vmem:[#allocation2] sm:$0xf] %v1673
    // Predicated region
    $region14: #{tpu_custom_call.1} parent=1 // pred_check
      _
    $region15: #{tpu_custom_call.1} parent=1 // pred_check_branch
      %1677 = sbr.rel (0) target = $region17
    $region16: #{tpu_custom_call.1} parent=1 // pred_region
      %s1679 = ssub.s32 64, 64
      %1680 = vsyncadd [#allocation3], %s1679
      %s1682 = sshll.u32 [#allocation2], 4
      %s1683 = int_to_ptr.vmem [resolvable:$true] %s1682
      %1685 = dma.vmem_to_hbm [thread:$0]  %s1683, 64, %s3, [#allocation3]
    $region17: #{tpu_custom_call.1} parent=1 // pred_fallthru
      _
    // Predicated region
    $region18: #{tpu_custom_call.1} parent=1 // pred_check
      _
    $region19: #{tpu_custom_call.1} parent=1 // pred_check_branch
      %1687 = sbr.rel (0) target = $region21
    $region20: #{tpu_custom_call.1} parent=1 // pred_region
      %1688 = dma.done [#allocation3], 64
    $region21: #{tpu_custom_call.1} parent=1 // pred_fallthru
      _
    %1689 = vsyncpa [#allocation3], 1

</llo_original>
